<compile_context>
chip_gen: v6e
topology: v6e:2x2x1
jax: 0.10.0
libtpu: 0.0.40
codegen_flags: <defaults>
</compile_context>

<pallas_src>
import functools
import math

import jax
import jax.numpy as jnp
from jax.experimental import pallas as pl
from jax.experimental.pallas import tpu as pltpu

LN_EPS = 1e-5  # torch.nn.LayerNorm default


# ----------------------------------------------------------------------------
# Fused kernel: one grid step == one batch element.
# ----------------------------------------------------------------------------
def cma2_kernel(xq_ref, xkv_ref, g_ref, beta_ref,
                wq_ref, bq_ref, wk_ref, bk_ref, wv_ref, bv_ref,
                wo_ref, bo_ref, wff_ref, bff_ref,
                out_ref, attw_ref, *, num_heads):
    g = g_ref[...]        # (1, D)  shared LayerNorm weight
    beta = beta_ref[...]  # (1, D)  shared LayerNorm bias

    def layer_norm(x):    # x: (S, D); normalize over the last (lane) dim
        mu = jnp.mean(x, axis=-1, keepdims=True)
        xc = x - mu
        var = jnp.mean(xc * xc, axis=-1, keepdims=True)
        return xc * jax.lax.rsqrt(var + LN_EPS) * g + beta

    xq = xq_ref[0]        # (S, D)  query-side residual stream (Zi_1_alpha_beta[b])
    xkv = xkv_ref[0]      # (S, D)  key/value stream           (Zi_1_alpha[b])

    zq = layer_norm(xq)
    zkv = layer_norm(xkv)

    # QKV projections (weights are pre-transposed to (in, out) in the wrapper).
    q = jnp.dot(zq, wq_ref[...], preferred_element_type=jnp.float32) + bq_ref[...]
    k = jnp.dot(zkv, wk_ref[...], preferred_element_type=jnp.float32) + bk_ref[...]
    v = jnp.dot(zkv, wv_ref[...], preferred_element_type=jnp.float32) + bv_ref[...]

    S, D = q.shape
    dh = D // num_heads
    scale = 1.0 / math.sqrt(dh)

    ctx_parts = []
    attw_acc = None
    for h in range(num_heads):                      # static unrolled head loop
        sl = slice(h * dh, (h + 1) * dh)
        qh, kh, vh = q[:, sl], k[:, sl], v[:, sl]   # (S, dh) lane slices
        s = jnp.einsum('id,jd->ij', qh, kh,
                       preferred_element_type=jnp.float32) * scale  # (S, S)
        m = jnp.max(s, axis=-1, keepdims=True)
        e = jnp.exp(s - m)
        p = e / jnp.sum(e, axis=-1, keepdims=True)  # softmax over keys
        attw_acc = p if attw_acc is None else attw_acc + p
        ctx_parts.append(jnp.dot(p, vh, preferred_element_type=jnp.float32))

    # nn.MultiheadAttention returns attn weights averaged over heads.
    attw_ref[0] = attw_acc * (1.0 / num_heads)

    ctx = jnp.concatenate(ctx_parts, axis=-1)       # (S, D)
    attn_out = jnp.dot(ctx, wo_ref[...],
                       preferred_element_type=jnp.float32) + bo_ref[...]

    cross = attn_out + xq                           # residual with the RAW input
    z_int = layer_norm(cross)
    z_ff = jnp.dot(z_int, wff_ref[...],
                   preferred_element_type=jnp.float32) + bff_ref[...]
    out_ref[0] = layer_norm(z_int + z_ff)


# ----------------------------------------------------------------------------
# Wrapper
# ----------------------------------------------------------------------------
def cross_modal_attention2(z_alpha_beta, z_alpha, params, num_heads):
    """z_*: (B, S, D) f32. params holds PyTorch-layout weights (out, in) / (D,)."""
    B, S, D = z_alpha_beta.shape
    assert D % num_heads == 0

    g = params["ln_gamma"].reshape(1, D)
    beta = params["ln_beta"].reshape(1, D)
    wq_t, wk_t, wv_t = params["wq"].T, params["wk"].T, params["wv"].T
    wo_t, wff_t = params["wo"].T, params["wff"].T
    bq = params["bq"].reshape(1, D)
    bk = params["bk"].reshape(1, D)
    bv = params["bv"].reshape(1, D)
    bo = params["bo"].reshape(1, D)
    bff = params["bff"].reshape(1, D)

    row_spec = pl.BlockSpec((1, S, D), lambda b: (b, 0, 0))   # per-batch activation block
    mat_spec = pl.BlockSpec((D, D), lambda b: (0, 0))         # weights: same block every step
    vec_spec = pl.BlockSpec((1, D), lambda b: (0, 0))         # biases / LN params

    out, attw = pl.pallas_call(
        functools.partial(cma2_kernel, num_heads=num_heads),
        out_shape=(
            jax.ShapeDtypeStruct((B, S, D), jnp.float32),
            jax.ShapeDtypeStruct((B, S, S), jnp.float32),
        ),
        grid_spec=pltpu.PrefetchScalarGridSpec(
            num_scalar_prefetch=0,
            grid=(B,),
            in_specs=[
                row_spec, row_spec,          # Zi_1_alpha_beta, Zi_1_alpha
                vec_spec, vec_spec,          # LayerNorm gamma, beta (shared)
                mat_spec, vec_spec,          # Wq^T, bq
                mat_spec, vec_spec,          # Wk^T, bk
                mat_spec, vec_spec,          # Wv^T, bv
                mat_spec, vec_spec,          # Wo^T, bo   (out_proj)
                mat_spec, vec_spec,          # Wff^T, bff (W_ff)
            ],
            out_specs=[
                pl.BlockSpec((1, S, D), lambda b: (b, 0, 0)),
                pl.BlockSpec((1, S, S), lambda b: (b, 0, 0)),
            ],
        ),
        compiler_params=pltpu.CompilerParams(
            dimension_semantics=("parallel",)),   # batch split across TCs on v7x
    )(z_alpha_beta, z_alpha, g, beta,
      wq_t, bq, wk_t, bk, wv_t, bv, wo_t, bo, wff_t, bff)

    return out, attw


# ----------------------------------------------------------------------------
# Pure-JAX reference (mirrors the PyTorch forward exactly)
# ----------------------------------------------------------------------------
def reference(z_alpha_beta, z_alpha, params, num_heads):
    D = z_alpha_beta.shape[-1]
    dh = D // num_heads
    g, beta = params["ln_gamma"], params["ln_beta"]

    def ln(x):
        mu = x.mean(-1, keepdims=True)
        var = ((x - mu) ** 2).mean(-1, keepdims=True)
        return (x - mu) / jnp.sqrt(var + LN_EPS) * g + beta

    zq, zkv = ln(z_alpha_beta), ln(z_alpha)
    q = zq @ params["wq"].T + params["bq"]
    k = zkv @ params["wk"].T + params["bk"]
    v = zkv @ params["wv"].T + params["bv"]
    B, S, _ = q.shape
    qh = q.reshape(B, S, num_heads, dh).transpose(0, 2, 1, 3)
    kh = k.reshape(B, S, num_heads, dh).transpose(0, 2, 1, 3)
    vh = v.reshape(B, S, num_heads, dh).transpose(0, 2, 1, 3)
    sc = jnp.einsum("bhid,bhjd->bhij", qh, kh) / math.sqrt(dh)
    p = jax.nn.softmax(sc, axis=-1)
    ctx = jnp.einsum("bhij,bhjd->bhid", p, vh).transpose(0, 2, 1, 3).reshape(B, S, D)
    attn_out = ctx @ params["wo"].T + params["bo"]
    attw = p.mean(axis=1)                           # averaged over heads
    cross = attn_out + z_alpha_beta
    z_int = ln(cross)
    z_ff = z_int @ params["wff"].T + params["bff"]
    return ln(z_int + z_ff), attw


if __name__ == "__main__":
    B, S, D, H = 2, 8, 32, 4
    key = jax.random.PRNGKey(0)
    keys = jax.random.split(key, 16)

    z_alpha_beta = jax.random.normal(keys[0], (B, S, D), jnp.float32)
    z_alpha = jax.random.normal(keys[1], (B, S, D), jnp.float32)

    bound = 1.0 / math.sqrt(D)

    def u(k, shape):
        return jax.random.uniform(k, shape, jnp.float32, -bound, bound)

    params = {
        "ln_gamma": 1.0 + 0.1 * jax.random.normal(keys[2], (D,), jnp.float32),
        "ln_beta": 0.1 * jax.random.normal(keys[3], (D,), jnp.float32),
        "wq": u(keys[4], (D, D)),  "bq": u(keys[5], (D,)),
        "wk": u(keys[6], (D, D)),  "bk": u(keys[7], (D,)),
        "wv": u(keys[8], (D, D)),  "bv": u(keys[9], (D,)),
        "wo": u(keys[10], (D, D)), "bo": u(keys[11], (D,)),
        "wff": u(keys[12], (D, D)), "bff": u(keys[13], (D,)),
    }

    out, attw = cross_modal_attention2(z_alpha_beta, z_alpha, params, H)
    jax.block_until_ready(out)
    jax.block_until_ready(attw)

    ref_out, ref_attw = reference(z_alpha_beta, z_alpha, params, H)
    assert jnp.allclose(out, ref_out, atol=1e-4, rtol=1e-4), \
        float(jnp.max(jnp.abs(out - ref_out)))
    assert jnp.allclose(attw, ref_attw, atol=1e-5, rtol=1e-5), \
        float(jnp.max(jnp.abs(attw - ref_attw)))

    print("KERNEL_OK")
</pallas_src>

<mosaic_0001>
module attributes {stable_mosaic.version = 11 : i64} {
  func.func @cma2_kernel(%arg0: i32, %arg1: memref<1x8x32xf32, #tpu.memory_space<vmem>>, %arg2: memref<1x8x32xf32, #tpu.memory_space<vmem>>, %arg3: memref<1x32xf32, #tpu.memory_space<vmem>>, %arg4: memref<1x32xf32, #tpu.memory_space<vmem>>, %arg5: memref<32x32xf32, #tpu.memory_space<vmem>>, %arg6: memref<1x32xf32, #tpu.memory_space<vmem>>, %arg7: memref<32x32xf32, #tpu.memory_space<vmem>>, %arg8: memref<1x32xf32, #tpu.memory_space<vmem>>, %arg9: memref<32x32xf32, #tpu.memory_space<vmem>>, %arg10: memref<1x32xf32, #tpu.memory_space<vmem>>, %arg11: memref<32x32xf32, #tpu.memory_space<vmem>>, %arg12: memref<1x32xf32, #tpu.memory_space<vmem>>, %arg13: memref<32x32xf32, #tpu.memory_space<vmem>>, %arg14: memref<1x32xf32, #tpu.memory_space<vmem>>, %arg15: memref<1x8x32xf32, #tpu.memory_space<vmem>>, %arg16: memref<1x8x8xf32, #tpu.memory_space<vmem>>) attributes {dimension_semantics = [#tpu.dimension_semantics<parallel>], iteration_bounds = array<i64: 2>, scalar_prefetch = 0 : i64, scratch_operands = 0 : i64, tpu.core_type = #tpu.core_type<tc>, window_params = [{transform_indices = @transform_0, window_bounds = array<i64: 1, 8, 32>}, {transform_indices = @transform_1, window_bounds = array<i64: 1, 8, 32>}, {pipeline_mode = #tpu.pipeline_mode<synchronous>, transform_indices = @transform_2, window_bounds = array<i64: 1, 32>}, {pipeline_mode = #tpu.pipeline_mode<synchronous>, transform_indices = @transform_3, window_bounds = array<i64: 1, 32>}, {pipeline_mode = #tpu.pipeline_mode<synchronous>, transform_indices = @transform_4, window_bounds = array<i64: 32, 32>}, {pipeline_mode = #tpu.pipeline_mode<synchronous>, transform_indices = @transform_5, window_bounds = array<i64: 1, 32>}, {pipeline_mode = #tpu.pipeline_mode<synchronous>, transform_indices = @transform_6, window_bounds = array<i64: 32, 32>}, {pipeline_mode = #tpu.pipeline_mode<synchronous>, transform_indices = @transform_7, window_bounds = array<i64: 1, 32>}, {pipeline_mode = #tpu.pipeline_mode<synchronous>, transform_indices = @transform_8, window_bounds = array<i64: 32, 32>}, {pipeline_mode = #tpu.pipeline_mode<synchronous>, transform_indices = @transform_9, window_bounds = array<i64: 1, 32>}, {pipeline_mode = #tpu.pipeline_mode<synchronous>, transform_indices = @transform_10, window_bounds = array<i64: 32, 32>}, {pipeline_mode = #tpu.pipeline_mode<synchronous>, transform_indices = @transform_11, window_bounds = array<i64: 1, 32>}, {pipeline_mode = #tpu.pipeline_mode<synchronous>, transform_indices = @transform_12, window_bounds = array<i64: 32, 32>}, {pipeline_mode = #tpu.pipeline_mode<synchronous>, transform_indices = @transform_13, window_bounds = array<i64: 1, 32>}, {transform_indices = @transform_14, window_bounds = array<i64: 1, 8, 32>}, {transform_indices = @transform_15, window_bounds = array<i64: 1, 8, 8>}]} {
    %c0 = arith.constant 0 : index
    %c0_0 = arith.constant 0 : index
    %0 = vector.load %arg3[%c0, %c0_0] : memref<1x32xf32, #tpu.memory_space<vmem>>, vector<1x32xf32>
    %c0_1 = arith.constant 0 : index
    %c0_2 = arith.constant 0 : index
    %1 = vector.load %arg4[%c0_1, %c0_2] : memref<1x32xf32, #tpu.memory_space<vmem>>, vector<1x32xf32>
    %c0_3 = arith.constant 0 : index
    %c0_4 = arith.constant 0 : index
    %c0_5 = arith.constant 0 : index
    %2 = vector.load %arg1[%c0_3, %c0_4, %c0_5] : memref<1x8x32xf32, #tpu.memory_space<vmem>>, vector<1x8x32xf32>
    %3 = vector.shape_cast %2 : vector<1x8x32xf32> to vector<8x32xf32>
    %c0_6 = arith.constant 0 : index
    %c0_7 = arith.constant 0 : index
    %c0_8 = arith.constant 0 : index
    %4 = vector.load %arg2[%c0_6, %c0_7, %c0_8] : memref<1x8x32xf32, #tpu.memory_space<vmem>>, vector<1x8x32xf32>
    %5 = vector.shape_cast %4 : vector<1x8x32xf32> to vector<8x32xf32>
    %cst = arith.constant dense<0.000000e+00> : vector<8xf32>
    %6 = vector.multi_reduction <add>, %3, %cst [1] : vector<8x32xf32> to vector<8xf32>
    %7 = vector.shape_cast %6 : vector<8xf32> to vector<8x1xf32>
    %cst_9 = arith.constant 3.200000e+01 : f32
    %8 = vector.broadcast %cst_9 : f32 to vector<8x1xf32>
    %9 = arith.divf %7, %8 : vector<8x1xf32>
    %10 = vector.broadcast %9 : vector<8x1xf32> to vector<8x32xf32>
    %11 = arith.subf %3, %10 : vector<8x32xf32>
    %12 = arith.mulf %11, %11 : vector<8x32xf32>
    %cst_10 = arith.constant dense<0.000000e+00> : vector<8xf32>
    %13 = vector.multi_reduction <add>, %12, %cst_10 [1] : vector<8x32xf32> to vector<8xf32>
    %14 = vector.shape_cast %13 : vector<8xf32> to vector<8x1xf32>
    %cst_11 = arith.constant 3.200000e+01 : f32
    %15 = vector.broadcast %cst_11 : f32 to vector<8x1xf32>
    %16 = arith.divf %14, %15 : vector<8x1xf32>
    %cst_12 = arith.constant 9.99999974E-6 : f32
    %17 = vector.broadcast %cst_12 : f32 to vector<8x1xf32>
    %18 = arith.addf %16, %17 : vector<8x1xf32>
    %19 = math.rsqrt %18 : vector<8x1xf32>
    %20 = vector.broadcast %19 : vector<8x1xf32> to vector<8x32xf32>
    %21 = arith.mulf %11, %20 : vector<8x32xf32>
    %22 = vector.broadcast %0 : vector<1x32xf32> to vector<8x32xf32>
    %23 = arith.mulf %21, %22 : vector<8x32xf32>
    %24 = vector.broadcast %1 : vector<1x32xf32> to vector<8x32xf32>
    %25 = arith.addf %23, %24 : vector<8x32xf32>
    %cst_13 = arith.constant dense<0.000000e+00> : vector<8xf32>
    %26 = vector.multi_reduction <add>, %5, %cst_13 [1] : vector<8x32xf32> to vector<8xf32>
    %27 = vector.shape_cast %26 : vector<8xf32> to vector<8x1xf32>
    %cst_14 = arith.constant 3.200000e+01 : f32
    %28 = vector.broadcast %cst_14 : f32 to vector<8x1xf32>
    %29 = arith.divf %27, %28 : vector<8x1xf32>
    %30 = vector.broadcast %29 : vector<8x1xf32> to vector<8x32xf32>
    %31 = arith.subf %5, %30 : vector<8x32xf32>
    %32 = arith.mulf %31, %31 : vector<8x32xf32>
    %cst_15 = arith.constant dense<0.000000e+00> : vector<8xf32>
    %33 = vector.multi_reduction <add>, %32, %cst_15 [1] : vector<8x32xf32> to vector<8xf32>
    %34 = vector.shape_cast %33 : vector<8xf32> to vector<8x1xf32>
    %cst_16 = arith.constant 3.200000e+01 : f32
    %35 = vector.broadcast %cst_16 : f32 to vector<8x1xf32>
    %36 = arith.divf %34, %35 : vector<8x1xf32>
    %cst_17 = arith.constant 9.99999974E-6 : f32
    %37 = vector.broadcast %cst_17 : f32 to vector<8x1xf32>
    %38 = arith.addf %36, %37 : vector<8x1xf32>
    %39 = math.rsqrt %38 : vector<8x1xf32>
    %40 = vector.broadcast %39 : vector<8x1xf32> to vector<8x32xf32>
    %41 = arith.mulf %31, %40 : vector<8x32xf32>
    %42 = vector.broadcast %0 : vector<1x32xf32> to vector<8x32xf32>
    %43 = arith.mulf %41, %42 : vector<8x32xf32>
    %44 = vector.broadcast %1 : vector<1x32xf32> to vector<8x32xf32>
    %45 = arith.addf %43, %44 : vector<8x32xf32>
    %c0_18 = arith.constant 0 : index
    %c0_19 = arith.constant 0 : index
    %46 = vector.load %arg5[%c0_18, %c0_19] : memref<32x32xf32, #tpu.memory_space<vmem>>, vector<32x32xf32>
    %cst_20 = arith.constant dense<0.000000e+00> : vector<8x32xf32>
    %47 = tpu.matmul %25, %46, %cst_20 {dimension_numbers = #tpu.dot_dimension_numbers<[1], [0], [0], [1], [0, 0, 1, 1], [], []>} : vector<8x32xf32>, vector<32x32xf32>, vector<8x32xf32> -> vector<8x32xf32>
    %c0_21 = arith.constant 0 : index
    %c0_22 = arith.constant 0 : index
    %48 = vector.load %arg6[%c0_21, %c0_22] : memref<1x32xf32, #tpu.memory_space<vmem>>, vector<1x32xf32>
    %49 = vector.broadcast %48 : vector<1x32xf32> to vector<8x32xf32>
    %50 = arith.addf %47, %49 : vector<8x32xf32>
    %c0_23 = arith.constant 0 : index
    %c0_24 = arith.constant 0 : index
    %51 = vector.load %arg7[%c0_23, %c0_24] : memref<32x32xf32, #tpu.memory_space<vmem>>, vector<32x32xf32>
    %cst_25 = arith.constant dense<0.000000e+00> : vector<8x32xf32>
    %52 = tpu.matmul %45, %51, %cst_25 {dimension_numbers = #tpu.dot_dimension_numbers<[1], [0], [0], [1], [0, 0, 1, 1], [], []>} : vector<8x32xf32>, vector<32x32xf32>, vector<8x32xf32> -> vector<8x32xf32>
    %c0_26 = arith.constant 0 : index
    %c0_27 = arith.constant 0 : index
    %53 = vector.load %arg8[%c0_26, %c0_27] : memref<1x32xf32, #tpu.memory_space<vmem>>, vector<1x32xf32>
    %54 = vector.broadcast %53 : vector<1x32xf32> to vector<8x32xf32>
    %55 = arith.addf %52, %54 : vector<8x32xf32>
    %c0_28 = arith.constant 0 : index
    %c0_29 = arith.constant 0 : index
    %56 = vector.load %arg9[%c0_28, %c0_29] : memref<32x32xf32, #tpu.memory_space<vmem>>, vector<32x32xf32>
    %cst_30 = arith.constant dense<0.000000e+00> : vector<8x32xf32>
    %57 = tpu.matmul %45, %56, %cst_30 {dimension_numbers = #tpu.dot_dimension_numbers<[1], [0], [0], [1], [0, 0, 1, 1], [], []>} : vector<8x32xf32>, vector<32x32xf32>, vector<8x32xf32> -> vector<8x32xf32>
    %c0_31 = arith.constant 0 : index
    %c0_32 = arith.constant 0 : index
    %58 = vector.load %arg10[%c0_31, %c0_32] : memref<1x32xf32, #tpu.memory_space<vmem>>, vector<1x32xf32>
    %59 = vector.broadcast %58 : vector<1x32xf32> to vector<8x32xf32>
    %60 = arith.addf %57, %59 : vector<8x32xf32>
    %61 = vector.extract_strided_slice %50 {offsets = [0, 0], sizes = [8, 8], strides = [1, 1]} : vector<8x32xf32> to vector<8x8xf32>
    %62 = vector.extract_strided_slice %55 {offsets = [0, 0], sizes = [8, 8], strides = [1, 1]} : vector<8x32xf32> to vector<8x8xf32>
    %63 = vector.extract_strided_slice %60 {offsets = [0, 0], sizes = [8, 8], strides = [1, 1]} : vector<8x32xf32> to vector<8x8xf32>
    "tpu.trace_start"() <{level = 10 : i32, message = "id,jd->ij"}> : () -> ()
    %cst_33 = arith.constant dense<0.000000e+00> : vector<8x8xf32>
    %64 = tpu.matmul %61, %62, %cst_33 {dimension_numbers = #tpu.dot_dimension_numbers<[1], [1], [0], [0], [0, 0, 1, 0], [], []>} : vector<8x8xf32>, vector<8x8xf32>, vector<8x8xf32> -> vector<8x8xf32>
    "tpu.trace_stop"() : () -> ()
    %cst_34 = arith.constant 0.353553385 : f32
    %65 = vector.broadcast %cst_34 : f32 to vector<8x8xf32>
    %66 = arith.mulf %64, %65 : vector<8x8xf32>
    %cst_35 = arith.constant dense<0xFF800000> : vector<8xf32>
    %67 = vector.multi_reduction <maximumf>, %66, %cst_35 [1] : vector<8x8xf32> to vector<8xf32>
    %68 = vector.shape_cast %67 : vector<8xf32> to vector<8x1xf32>
    %69 = vector.broadcast %68 : vector<8x1xf32> to vector<8x8xf32>
    %70 = arith.subf %66, %69 : vector<8x8xf32>
    %71 = math.exp %70 : vector<8x8xf32>
    %cst_36 = arith.constant dense<0.000000e+00> : vector<8xf32>
    %72 = vector.multi_reduction <add>, %71, %cst_36 [1] : vector<8x8xf32> to vector<8xf32>
    %73 = vector.shape_cast %72 : vector<8xf32> to vector<8x1xf32>
    %74 = vector.broadcast %73 : vector<8x1xf32> to vector<8x8xf32>
    %75 = arith.divf %71, %74 : vector<8x8xf32>
    %cst_37 = arith.constant dense<0.000000e+00> : vector<8x8xf32>
    %76 = tpu.matmul %75, %63, %cst_37 {dimension_numbers = #tpu.dot_dimension_numbers<[1], [0], [0], [1], [0, 0, 1, 1], [], []>} : vector<8x8xf32>, vector<8x8xf32>, vector<8x8xf32> -> vector<8x8xf32>
    %77 = vector.extract_strided_slice %50 {offsets = [0, 8], sizes = [8, 8], strides = [1, 1]} : vector<8x32xf32> to vector<8x8xf32>
    %78 = vector.extract_strided_slice %55 {offsets = [0, 8], sizes = [8, 8], strides = [1, 1]} : vector<8x32xf32> to vector<8x8xf32>
    %79 = vector.extract_strided_slice %60 {offsets = [0, 8], sizes = [8, 8], strides = [1, 1]} : vector<8x32xf32> to vector<8x8xf32>
    "tpu.trace_start"() <{level = 10 : i32, message = "id,jd->ij"}> : () -> ()
    %cst_38 = arith.constant dense<0.000000e+00> : vector<8x8xf32>
    %80 = tpu.matmul %77, %78, %cst_38 {dimension_numbers = #tpu.dot_dimension_numbers<[1], [1], [0], [0], [0, 0, 1, 0], [], []>} : vector<8x8xf32>, vector<8x8xf32>, vector<8x8xf32> -> vector<8x8xf32>
    "tpu.trace_stop"() : () -> ()
    %cst_39 = arith.constant 0.353553385 : f32
    %81 = vector.broadcast %cst_39 : f32 to vector<8x8xf32>
    %82 = arith.mulf %80, %81 : vector<8x8xf32>
    %cst_40 = arith.constant dense<0xFF800000> : vector<8xf32>
    %83 = vector.multi_reduction <maximumf>, %82, %cst_40 [1] : vector<8x8xf32> to vector<8xf32>
    %84 = vector.shape_cast %83 : vector<8xf32> to vector<8x1xf32>
    %85 = vector.broadcast %84 : vector<8x1xf32> to vector<8x8xf32>
    %86 = arith.subf %82, %85 : vector<8x8xf32>
    %87 = math.exp %86 : vector<8x8xf32>
    %cst_41 = arith.constant dense<0.000000e+00> : vector<8xf32>
    %88 = vector.multi_reduction <add>, %87, %cst_41 [1] : vector<8x8xf32> to vector<8xf32>
    %89 = vector.shape_cast %88 : vector<8xf32> to vector<8x1xf32>
    %90 = vector.broadcast %89 : vector<8x1xf32> to vector<8x8xf32>
    %91 = arith.divf %87, %90 : vector<8x8xf32>
    %92 = arith.addf %75, %91 : vector<8x8xf32>
    %cst_42 = arith.constant dense<0.000000e+00> : vector<8x8xf32>
    %93 = tpu.matmul %91, %79, %cst_42 {dimension_numbers = #tpu.dot_dimension_numbers<[1], [0], [0], [1], [0, 0, 1, 1], [], []>} : vector<8x8xf32>, vector<8x8xf32>, vector<8x8xf32> -> vector<8x8xf32>
    %94 = vector.extract_strided_slice %50 {offsets = [0, 16], sizes = [8, 8], strides = [1, 1]} : vector<8x32xf32> to vector<8x8xf32>
    %95 = vector.extract_strided_slice %55 {offsets = [0, 16], sizes = [8, 8], strides = [1, 1]} : vector<8x32xf32> to vector<8x8xf32>
    %96 = vector.extract_strided_slice %60 {offsets = [0, 16], sizes = [8, 8], strides = [1, 1]} : vector<8x32xf32> to vector<8x8xf32>
    "tpu.trace_start"() <{level = 10 : i32, message = "id,jd->ij"}> : () -> ()
    %cst_43 = arith.constant dense<0.000000e+00> : vector<8x8xf32>
    %97 = tpu.matmul %94, %95, %cst_43 {dimension_numbers = #tpu.dot_dimension_numbers<[1], [1], [0], [0], [0, 0, 1, 0], [], []>} : vector<8x8xf32>, vector<8x8xf32>, vector<8x8xf32> -> vector<8x8xf32>
    "tpu.trace_stop"() : () -> ()
    %cst_44 = arith.constant 0.353553385 : f32
    %98 = vector.broadcast %cst_44 : f32 to vector<8x8xf32>
    %99 = arith.mulf %97, %98 : vector<8x8xf32>
    %cst_45 = arith.constant dense<0xFF800000> : vector<8xf32>
    %100 = vector.multi_reduction <maximumf>, %99, %cst_45 [1] : vector<8x8xf32> to vector<8xf32>
    %101 = vector.shape_cast %100 : vector<8xf32> to vector<8x1xf32>
    %102 = vector.broadcast %101 : vector<8x1xf32> to vector<8x8xf32>
    %103 = arith.subf %99, %102 : vector<8x8xf32>
    %104 = math.exp %103 : vector<8x8xf32>
    %cst_46 = arith.constant dense<0.000000e+00> : vector<8xf32>
    %105 = vector.multi_reduction <add>, %104, %cst_46 [1] : vector<8x8xf32> to vector<8xf32>
    %106 = vector.shape_cast %105 : vector<8xf32> to vector<8x1xf32>
    %107 = vector.broadcast %106 : vector<8x1xf32> to vector<8x8xf32>
    %108 = arith.divf %104, %107 : vector<8x8xf32>
    %109 = arith.addf %92, %108 : vector<8x8xf32>
    %cst_47 = arith.constant dense<0.000000e+00> : vector<8x8xf32>
    %110 = tpu.matmul %108, %96, %cst_47 {dimension_numbers = #tpu.dot_dimension_numbers<[1], [0], [0], [1], [0, 0, 1, 1], [], []>} : vector<8x8xf32>, vector<8x8xf32>, vector<8x8xf32> -> vector<8x8xf32>
    %111 = vector.extract_strided_slice %50 {offsets = [0, 24], sizes = [8, 8], strides = [1, 1]} : vector<8x32xf32> to vector<8x8xf32>
    %112 = vector.extract_strided_slice %55 {offsets = [0, 24], sizes = [8, 8], strides = [1, 1]} : vector<8x32xf32> to vector<8x8xf32>
    %113 = vector.extract_strided_slice %60 {offsets = [0, 24], sizes = [8, 8], strides = [1, 1]} : vector<8x32xf32> to vector<8x8xf32>
    "tpu.trace_start"() <{level = 10 : i32, message = "id,jd->ij"}> : () -> ()
    %cst_48 = arith.constant dense<0.000000e+00> : vector<8x8xf32>
    %114 = tpu.matmul %111, %112, %cst_48 {dimension_numbers = #tpu.dot_dimension_numbers<[1], [1], [0], [0], [0, 0, 1, 0], [], []>} : vector<8x8xf32>, vector<8x8xf32>, vector<8x8xf32> -> vector<8x8xf32>
    "tpu.trace_stop"() : () -> ()
    %cst_49 = arith.constant 0.353553385 : f32
    %115 = vector.broadcast %cst_49 : f32 to vector<8x8xf32>
    %116 = arith.mulf %114, %115 : vector<8x8xf32>
    %cst_50 = arith.constant dense<0xFF800000> : vector<8xf32>
    %117 = vector.multi_reduction <maximumf>, %116, %cst_50 [1] : vector<8x8xf32> to vector<8xf32>
    %118 = vector.shape_cast %117 : vector<8xf32> to vector<8x1xf32>
    %119 = vector.broadcast %118 : vector<8x1xf32> to vector<8x8xf32>
    %120 = arith.subf %116, %119 : vector<8x8xf32>
    %121 = math.exp %120 : vector<8x8xf32>
    %cst_51 = arith.constant dense<0.000000e+00> : vector<8xf32>
    %122 = vector.multi_reduction <add>, %121, %cst_51 [1] : vector<8x8xf32> to vector<8xf32>
    %123 = vector.shape_cast %122 : vector<8xf32> to vector<8x1xf32>
    %124 = vector.broadcast %123 : vector<8x1xf32> to vector<8x8xf32>
    %125 = arith.divf %121, %124 : vector<8x8xf32>
    %126 = arith.addf %109, %125 : vector<8x8xf32>
    %cst_52 = arith.constant dense<0.000000e+00> : vector<8x8xf32>
    %127 = tpu.matmul %125, %113, %cst_52 {dimension_numbers = #tpu.dot_dimension_numbers<[1], [0], [0], [1], [0, 0, 1, 1], [], []>} : vector<8x8xf32>, vector<8x8xf32>, vector<8x8xf32> -> vector<8x8xf32>
    %cst_53 = arith.constant 2.500000e-01 : f32
    %128 = vector.broadcast %cst_53 : f32 to vector<8x8xf32>
    %129 = arith.mulf %126, %128 : vector<8x8xf32>
    %c0_54 = arith.constant 0 : index
    %c0_55 = arith.constant 0 : index
    %c0_56 = arith.constant 0 : index
    %130 = vector.load %arg16[%c0_54, %c0_55, %c0_56] : memref<1x8x8xf32, #tpu.memory_space<vmem>>, vector<1x8x8xf32>
    %131 = vector.shape_cast %130 : vector<1x8x8xf32> to vector<8x8xf32>
    %132 = vector.shape_cast %129 : vector<8x8xf32> to vector<1x8x8xf32>
    tpu.vector_store %arg16[%c0_54, %c0_55, %c0_56], %132 {strides = array<i32>} : memref<1x8x8xf32, #tpu.memory_space<vmem>>, vector<1x8x8xf32>,
    %133 = tpu.concatenate %76, %93, %110, %127 in 1 : vector<8x8xf32>, vector<8x8xf32>, vector<8x8xf32>, vector<8x8xf32> -> vector<8x32xf32>
    %c0_57 = arith.constant 0 : index
    %c0_58 = arith.constant 0 : index
    %134 = vector.load %arg11[%c0_57, %c0_58] : memref<32x32xf32, #tpu.memory_space<vmem>>, vector<32x32xf32>
    %cst_59 = arith.constant dense<0.000000e+00> : vector<8x32xf32>
    %135 = tpu.matmul %133, %134, %cst_59 {dimension_numbers = #tpu.dot_dimension_numbers<[1], [0], [0], [1], [0, 0, 1, 1], [], []>} : vector<8x32xf32>, vector<32x32xf32>, vector<8x32xf32> -> vector<8x32xf32>
    %c0_60 = arith.constant 0 : index
    %c0_61 = arith.constant 0 : index
    %136 = vector.load %arg12[%c0_60, %c0_61] : memref<1x32xf32, #tpu.memory_space<vmem>>, vector<1x32xf32>
    %137 = vector.broadcast %136 : vector<1x32xf32> to vector<8x32xf32>
    %138 = arith.addf %135, %137 : vector<8x32xf32>
    %139 = arith.addf %138, %3 : vector<8x32xf32>
    %cst_62 = arith.constant dense<0.000000e+00> : vector<8xf32>
    %140 = vector.multi_reduction <add>, %139, %cst_62 [1] : vector<8x32xf32> to vector<8xf32>
    %141 = vector.shape_cast %140 : vector<8xf32> to vector<8x1xf32>
    %cst_63 = arith.constant 3.200000e+01 : f32
    %142 = vector.broadcast %cst_63 : f32 to vector<8x1xf32>
    %143 = arith.divf %141, %142 : vector<8x1xf32>
    %144 = vector.broadcast %143 : vector<8x1xf32> to vector<8x32xf32>
    %145 = arith.subf %139, %144 : vector<8x32xf32>
    %146 = arith.mulf %145, %145 : vector<8x32xf32>
    %cst_64 = arith.constant dense<0.000000e+00> : vector<8xf32>
    %147 = vector.multi_reduction <add>, %146, %cst_64 [1] : vector<8x32xf32> to vector<8xf32>
    %148 = vector.shape_cast %147 : vector<8xf32> to vector<8x1xf32>
    %cst_65 = arith.constant 3.200000e+01 : f32
    %149 = vector.broadcast %cst_65 : f32 to vector<8x1xf32>
    %150 = arith.divf %148, %149 : vector<8x1xf32>
    %cst_66 = arith.constant 9.99999974E-6 : f32
    %151 = vector.broadcast %cst_66 : f32 to vector<8x1xf32>
    %152 = arith.addf %150, %151 : vector<8x1xf32>
    %153 = math.rsqrt %152 : vector<8x1xf32>
    %154 = vector.broadcast %153 : vector<8x1xf32> to vector<8x32xf32>
    %155 = arith.mulf %145, %154 : vector<8x32xf32>
    %156 = vector.broadcast %0 : vector<1x32xf32> to vector<8x32xf32>
    %157 = arith.mulf %155, %156 : vector<8x32xf32>
    %158 = vector.broadcast %1 : vector<1x32xf32> to vector<8x32xf32>
    %159 = arith.addf %157, %158 : vector<8x32xf32>
    %c0_67 = arith.constant 0 : index
    %c0_68 = arith.constant 0 : index
    %160 = vector.load %arg13[%c0_67, %c0_68] : memref<32x32xf32, #tpu.memory_space<vmem>>, vector<32x32xf32>
    %cst_69 = arith.constant dense<0.000000e+00> : vector<8x32xf32>
    %161 = tpu.matmul %159, %160, %cst_69 {dimension_numbers = #tpu.dot_dimension_numbers<[1], [0], [0], [1], [0, 0, 1, 1], [], []>} : vector<8x32xf32>, vector<32x32xf32>, vector<8x32xf32> -> vector<8x32xf32>
    %c0_70 = arith.constant 0 : index
    %c0_71 = arith.constant 0 : index
    %162 = vector.load %arg14[%c0_70, %c0_71] : memref<1x32xf32, #tpu.memory_space<vmem>>, vector<1x32xf32>
    %163 = vector.broadcast %162 : vector<1x32xf32> to vector<8x32xf32>
    %164 = arith.addf %161, %163 : vector<8x32xf32>
    %165 = arith.addf %159, %164 : vector<8x32xf32>
    %cst_72 = arith.constant dense<0.000000e+00> : vector<8xf32>
    %166 = vector.multi_reduction <add>, %165, %cst_72 [1] : vector<8x32xf32> to vector<8xf32>
    %167 = vector.shape_cast %166 : vector<8xf32> to vector<8x1xf32>
    %cst_73 = arith.constant 3.200000e+01 : f32
    %168 = vector.broadcast %cst_73 : f32 to vector<8x1xf32>
    %169 = arith.divf %167, %168 : vector<8x1xf32>
    %170 = vector.broadcast %169 : vector<8x1xf32> to vector<8x32xf32>
    %171 = arith.subf %165, %170 : vector<8x32xf32>
    %172 = arith.mulf %171, %171 : vector<8x32xf32>
    %cst_74 = arith.constant dense<0.000000e+00> : vector<8xf32>
    %173 = vector.multi_reduction <add>, %172, %cst_74 [1] : vector<8x32xf32> to vector<8xf32>
    %174 = vector.shape_cast %173 : vector<8xf32> to vector<8x1xf32>
    %cst_75 = arith.constant 3.200000e+01 : f32
    %175 = vector.broadcast %cst_75 : f32 to vector<8x1xf32>
    %176 = arith.divf %174, %175 : vector<8x1xf32>
    %cst_76 = arith.constant 9.99999974E-6 : f32
    %177 = vector.broadcast %cst_76 : f32 to vector<8x1xf32>
    %178 = arith.addf %176, %177 : vector<8x1xf32>
    %179 = math.rsqrt %178 : vector<8x1xf32>
    %180 = vector.broadcast %179 : vector<8x1xf32> to vector<8x32xf32>
    %181 = arith.mulf %171, %180 : vector<8x32xf32>
    %182 = vector.broadcast %0 : vector<1x32xf32> to vector<8x32xf32>
    %183 = arith.mulf %181, %182 : vector<8x32xf32>
    %184 = vector.broadcast %1 : vector<1x32xf32> to vector<8x32xf32>
    %185 = arith.addf %183, %184 : vector<8x32xf32>
    %c0_77 = arith.constant 0 : index
    %c0_78 = arith.constant 0 : index
    %c0_79 = arith.constant 0 : index
    %186 = vector.load %arg15[%c0_77, %c0_78, %c0_79] : memref<1x8x32xf32, #tpu.memory_space<vmem>>, vector<1x8x32xf32>
    %187 = vector.shape_cast %186 : vector<1x8x32xf32> to vector<8x32xf32>
    %188 = vector.shape_cast %185 : vector<8x32xf32> to vector<1x8x32xf32>
    tpu.vector_store %arg15[%c0_77, %c0_78, %c0_79], %188 {strides = array<i32>} : memref<1x8x32xf32, #tpu.memory_space<vmem>>, vector<1x8x32xf32>,
    return
  }
  func.func @transform_0(%arg0: i32) -> (i32, i32, i32) {
    %c0_i32 = arith.constant 0 : i32
    %c0_i32_0 = arith.constant 0 : i32
    %c0_i32_1 = arith.constant 0 : i32
    return %arg0, %c0_i32, %c0_i32_0 : i32, i32, i32
  }
  func.func @transform_1(%arg0: i32) -> (i32, i32, i32) {
    %c0_i32 = arith.constant 0 : i32
    %c0_i32_0 = arith.constant 0 : i32
    %c0_i32_1 = arith.constant 0 : i32
    return %arg0, %c0_i32, %c0_i32_0 : i32, i32, i32
  }
  func.func @transform_2(%arg0: i32) -> (i32, i32) {
    %c0_i32 = arith.constant 0 : i32
    %c0_i32_0 = arith.constant 0 : i32
    %c0_i32_1 = arith.constant 0 : i32
    return %c0_i32, %c0_i32_0 : i32, i32
  }
  func.func @transform_3(%arg0: i32) -> (i32, i32) {
    %c0_i32 = arith.constant 0 : i32
    %c0_i32_0 = arith.constant 0 : i32
    %c0_i32_1 = arith.constant 0 : i32
    return %c0_i32, %c0_i32_0 : i32, i32
  }
  func.func @transform_4(%arg0: i32) -> (i32, i32) {
    %c0_i32 = arith.constant 0 : i32
    %c0_i32_0 = arith.constant 0 : i32
    %c0_i32_1 = arith.constant 0 : i32
    return %c0_i32, %c0_i32_0 : i32, i32
  }
  func.func @transform_5(%arg0: i32) -> (i32, i32) {
    %c0_i32 = arith.constant 0 : i32
    %c0_i32_0 = arith.constant 0 : i32
    %c0_i32_1 = arith.constant 0 : i32
    return %c0_i32, %c0_i32_0 : i32, i32
  }
  func.func @transform_6(%arg0: i32) -> (i32, i32) {
    %c0_i32 = arith.constant 0 : i32
    %c0_i32_0 = arith.constant 0 : i32
    %c0_i32_1 = arith.constant 0 : i32
    return %c0_i32, %c0_i32_0 : i32, i32
  }
  func.func @transform_7(%arg0: i32) -> (i32, i32) {
    %c0_i32 = arith.constant 0 : i32
    %c0_i32_0 = arith.constant 0 : i32
    %c0_i32_1 = arith.constant 0 : i32
    return %c0_i32, %c0_i32_0 : i32, i32
  }
  func.func @transform_8(%arg0: i32) -> (i32, i32) {
    %c0_i32 = arith.constant 0 : i32
    %c0_i32_0 = arith.constant 0 : i32
    %c0_i32_1 = arith.constant 0 : i32
    return %c0_i32, %c0_i32_0 : i32, i32
  }
  func.func @transform_9(%arg0: i32) -> (i32, i32) {
    %c0_i32 = arith.constant 0 : i32
    %c0_i32_0 = arith.constant 0 : i32
    %c0_i32_1 = arith.constant 0 : i32
    return %c0_i32, %c0_i32_0 : i32, i32
  }
  func.func @transform_10(%arg0: i32) -> (i32, i32) {
    %c0_i32 = arith.constant 0 : i32
    %c0_i32_0 = arith.constant 0 : i32
    %c0_i32_1 = arith.constant 0 : i32
    return %c0_i32, %c0_i32_0 : i32, i32
  }
  func.func @transform_11(%arg0: i32) -> (i32, i32) {
    %c0_i32 = arith.constant 0 : i32
    %c0_i32_0 = arith.constant 0 : i32
    %c0_i32_1 = arith.constant 0 : i32
    return %c0_i32, %c0_i32_0 : i32, i32
  }
  func.func @transform_12(%arg0: i32) -> (i32, i32) {
    %c0_i32 = arith.constant 0 : i32
    %c0_i32_0 = arith.constant 0 : i32
    %c0_i32_1 = arith.constant 0 : i32
    return %c0_i32, %c0_i32_0 : i32, i32
  }
  func.func @transform_13(%arg0: i32) -> (i32, i32) {
    %c0_i32 = arith.constant 0 : i32
    %c0_i32_0 = arith.constant 0 : i32
    %c0_i32_1 = arith.constant 0 : i32
    return %c0_i32, %c0_i32_0 : i32, i32
  }
  func.func @transform_14(%arg0: i32) -> (i32, i32, i32) {
    %c0_i32 = arith.constant 0 : i32
    %c0_i32_0 = arith.constant 0 : i32
    %c0_i32_1 = arith.constant 0 : i32
    return %arg0, %c0_i32, %c0_i32_0 : i32, i32, i32
  }
  func.func @transform_15(%arg0: i32) -> (i32, i32, i32) {
    %c0_i32 = arith.constant 0 : i32
    %c0_i32_0 = arith.constant 0 : i32
    %c0_i32_1 = arith.constant 0 : i32
    return %arg0, %c0_i32, %c0_i32_0 : i32, i32, i32
  }
}

</mosaic_0001>

<llo_original>
// kernel: tpu_custom_call.1
$region0: #{tpu_custom_call.1}
  #allocation0 [shape = 'u32[]', space=smem, size = 0x4, offset = 0x4, fixed_abs, tag = 'smem constant byte address 0x4 - core index']
  #allocation1 [shape = 'u32[144,128]{1,0:T(1,128)}', space=vmem, size = 0x12000, scoped, tag = 'internal scratch']
  %s0 = inlined_call_operand.hbm [shape: f32[2,8,32], index: 0, kind: input, shape index: {}]
  %s1 = inlined_call_operand.hbm [shape: f32[2,8,32], index: 1, kind: input, shape index: {}]
  %s2 = inlined_call_operand.vmem [shape: f32[1,32], index: 2, kind: input, shape index: {}]
  %s3 = inlined_call_operand.vmem [shape: f32[1,32], index: 3, kind: input, shape index: {}]
  %s4 = inlined_call_operand.hbm [shape: f32[32,32], index: 4, kind: input, shape index: {}]
  %s5 = inlined_call_operand.vmem [shape: f32[1,32], index: 5, kind: input, shape index: {}]
  %s6 = inlined_call_operand.hbm [shape: f32[32,32], index: 6, kind: input, shape index: {}]
  %s7 = inlined_call_operand.vmem [shape: f32[1,32], index: 7, kind: input, shape index: {}]
  %s8 = inlined_call_operand.hbm [shape: f32[32,32], index: 8, kind: input, shape index: {}]
  %s9 = inlined_call_operand.vmem [shape: f32[1,32], index: 9, kind: input, shape index: {}]
  %s10 = inlined_call_operand.hbm [shape: f32[32,32], index: 10, kind: input, shape index: {}]
  %s11 = inlined_call_operand.vmem [shape: f32[1,32], index: 11, kind: input, shape index: {}]
  %s12 = inlined_call_operand.hbm [shape: f32[32,32], index: 12, kind: input, shape index: {}]
  %s13 = inlined_call_operand.vmem [shape: f32[1,32], index: 13, kind: input, shape index: {}]
  %s14 = inlined_call_operand.hbm [shape: f32[2,8,32], index: 14, kind: output, shape index: {0}]
  %s15 = inlined_call_operand.hbm [shape: f32[2,8,8], index: 15, kind: output, shape index: {1}]
  %16 = xla_tuple %s14, %s15
  %s17 = sld [smem:[#allocation0]]
  $region125: #{tpu_custom_call.1} parent=0
    _
  %s19 = ssub.s32 1, %s17
  %s20 = scalar_select 0, %s19, %s17
  $region1: #{tpu_custom_call.1} parent=0
    #allocation2 [shape = 'u8[8192]{0}', space=vmem, size = 0x2000, scoped, tag = 'input window, operand 0']
    #allocation3 [shape = 's32[2]{0}', space=sflag, size = 0x8, scoped, tag = 'scoped memory for tpu_custom_call.1']
    #allocation4 [shape = 's32[2]{0}', space=sflag, size = 0x8, scoped, tag = 'scoped memory for tpu_custom_call.1']
    #allocation5 [shape = 'u8[8192]{0}', space=vmem, size = 0x2000, scoped, tag = 'input window, operand 1']
    #allocation6 [shape = 's32[2]{0}', space=sflag, size = 0x8, scoped, tag = 'scoped memory for tpu_custom_call.1']
    #allocation7 [shape = 'u8[16384]{0}', space=vmem, size = 0x4000, scoped, tag = 'input window, operand 4, single buffered']
    #allocation8 [shape = 'u8[16384]{0}', space=vmem, size = 0x4000, scoped, tag = 'input window, operand 6, single buffered']
    #allocation9 [shape = 's32[1]{0}', space=sflag, size = 0x4, scoped, tag = 'scoped memory for tpu_custom_call.1']
    #allocation10 [shape = 'u8[16384]{0}', space=vmem, size = 0x4000, scoped, tag = 'input window, operand 8, single buffered']
    #allocation11 [shape = 'u8[16384]{0}', space=vmem, size = 0x4000, scoped, tag = 'input window, operand 10, single buffered']
    #allocation12 [shape = 's32[1]{0}', space=sflag, size = 0x4, scoped, tag = 'scoped memory for tpu_custom_call.1']
    #allocation13 [shape = 'u8[16384]{0}', space=vmem, size = 0x4000, scoped, tag = 'input window, operand 12, single buffered']
    #allocation14 [shape = 'u8[8192]{0}', space=vmem, size = 0x2000, scoped, tag = 'output window, operand 0']
    #allocation15 [shape = 'u8[8192]{0}', space=vmem, size = 0x2000, scoped, tag = 'output window, operand 1']
    #allocation16 [shape = 's32[2]{0}', space=sflag, size = 0x8, scoped, tag = 'scoped memory for tpu_custom_call.1']
    %21 = vsyncpa [#allocation3], 0
    %s22 = scalar_lea.sflag [#allocation3], 1
    %23 = vsyncpa %s22, 0
    %24 = vsyncpa [#allocation6], 0
    %s25 = scalar_lea.sflag [#allocation6], 1
    %26 = vsyncpa %s25, 0
    %27 = vsyncpa [#allocation9], 0
    %28 = vsyncpa [#allocation12], 0
    %29 = vsyncpa [#allocation4], 0
    %s30 = scalar_lea.sflag [#allocation4], 1
    %31 = vsyncpa %s30, 0
    %32 = vsyncpa [#allocation16], 0
    %s33 = scalar_lea.sflag [#allocation16], 1
    %34 = vsyncpa %s33, 0
    loop: start=0, step=1, limit=4
    $region2: #{tpu_custom_call.1} parent=1 // loop_pre_header
      _
    $region3: #{tpu_custom_call.1} parent=1 // loop_header
      %s36 = sphi 0, %s40
      %p37 = scmp.ge.s32.totalorder %s36, 4
      %s46 = sphi 0, %s48
      %s49 = sphi 0, %s46
      %s50 = sphi 0, %s49
      %s66 = sphi 0, %s50
      %s72 = sphi 0, %s74
      %s75 = sphi 0, %s72
      %s76 = sphi 0, %s75
      %s92 = sphi 0, %s76
      %s96 = sphi 0, %s96
      %s98 = sphi 0, %s96
      %s99 = sphi 0, %s98
      %s113 = sphi 0, %s99
      %s117 = sphi 0, %s117
      %s119 = sphi 0, %s117
      %s120 = sphi 0, %s119
      %s134 = sphi 0, %s120
      %s138 = sphi 0, %s138
      %s140 = sphi 0, %s138
      %s141 = sphi 0, %s140
      %s155 = sphi 0, %s141
      %s159 = sphi 0, %s159
      %s161 = sphi 0, %s159
      %s162 = sphi 0, %s161
      %s176 = sphi 0, %s162
      %s180 = sphi 0, %s180
      %s182 = sphi 0, %s180
      %s183 = sphi 0, %s182
      %s197 = sphi 0, %s183
      %s201 = sphi 0, %s201
      %s203 = sphi 0, %s201
      %s204 = sphi 0, %s203
      %s218 = sphi 0, %s204
      %s222 = sphi 0, %s222
      %s224 = sphi 0, %s222
      %s225 = sphi 0, %s224
      %s239 = sphi 0, %s225
      %s243 = sphi 0, %s243
      %s245 = sphi 0, %s243
      %s246 = sphi 0, %s245
      %s260 = sphi 0, %s246
      %s264 = sphi 0, %s264
      %s266 = sphi 0, %s264
      %s267 = sphi 0, %s266
      %s281 = sphi 0, %s267
      %s285 = sphi 0, %s285
      %s287 = sphi 0, %s285
      %s288 = sphi 0, %s287
      %s302 = sphi 0, %s288
      %s306 = sphi 0, %s306
      %s308 = sphi 0, %s306
      %s309 = sphi 0, %s308
      %s323 = sphi 0, %s309
      %s327 = sphi 0, %s327
      %s329 = sphi 0, %s327
      %s330 = sphi 0, %s329
      %s344 = sphi 0, %s330
      %s350 = sphi 0, %s352
      %s353 = sphi 0, %s350
      %s354 = sphi 0, %s353
      %s370 = sphi 0, %s354
      %s376 = sphi 0, %s378
      %s379 = sphi 0, %s376
      %s380 = sphi 0, %s379
      %s396 = sphi 0, %s380
    $region4: #{tpu_custom_call.1} parent=1 // loop_header_branch
      %39 = sbr.rel (%p37) target = $region8
    $region5: #{tpu_custom_call.1} parent=1 // loop_body
      %s41 = ssub.s32 %s36, 1
      %s42 = ssub.s32 %s36, 2
      %s43 = sadd.s32 %s36, 1
      %s44 = ssub.s32 %s36, %s43
      %p45 = scmp.eq.s32.totalorder %s44, 0
      %s47 = sadd.s32 %s46, 1
      %s48 = scalar_select %p45, %s46, %s47
      %p51 = pneg %p45
      %p52 = scmp.eq.s32.totalorder %s36, 1
      %p53 = por %p51, %p52
      %p54 = scmp.ne.s32.totalorder %s46, %s49
      %p55 = scmp.eq.s32.totalorder %s36, 0
      %p56 = por %p54, %p55
      %p57 = scmp.ne.s32.totalorder %s46, %s49
      %p58 = scmp.eq.s32.totalorder %s41, 1
      %p59 = por %p57, %p58
      %p60 = scmp.ne.s32.totalorder %s49, %s50
      %p61 = scmp.eq.s32.totalorder %s41, 0
      %p62 = por %p60, %p61
      %p63 = scmp.ne.s32.totalorder %s49, %s50
      %p64 = scmp.eq.s32.totalorder %s42, 1
      %p65 = por %p63, %p64
      %p67 = scmp.ne.s32.totalorder %s50, %s66
      %p68 = scmp.eq.s32.totalorder %s42, 0
      %p69 = por %p67, %p68
      %s70 = ssub.s32 %s36, %s43
      %p71 = scmp.eq.s32.totalorder %s70, 0
      %s73 = sadd.s32 %s72, 1
      %s74 = scalar_select %p71, %s72, %s73
      %p77 = pneg %p71
      %p78 = scmp.eq.s32.totalorder %s36, 1
      %p79 = por %p77, %p78
      %p80 = scmp.ne.s32.totalorder %s72, %s75
      %p81 = scmp.eq.s32.totalorder %s36, 0
      %p82 = por %p80, %p81
      %p83 = scmp.ne.s32.totalorder %s72, %s75
      %p84 = scmp.eq.s32.totalorder %s41, 1
      %p85 = por %p83, %p84
      %p86 = scmp.ne.s32.totalorder %s75, %s76
      %p87 = scmp.eq.s32.totalorder %s41, 0
      %p88 = por %p86, %p87
      %p89 = scmp.ne.s32.totalorder %s75, %s76
      %p90 = scmp.eq.s32.totalorder %s42, 1
      %p91 = por %p89, %p90
      %p93 = scmp.ne.s32.totalorder %s76, %s92
      %p94 = scmp.eq.s32.totalorder %s42, 0
      %p95 = por %p93, %p94
      %s97 = sadd.s32 %s96, 1
      %p100 = scmp.eq.s32.totalorder %s36, 1
      %p101 = scmp.ne.s32.totalorder %s96, %s98
      %p102 = scmp.eq.s32.totalorder %s36, 0
      %p103 = por %p101, %p102
      %p104 = scmp.ne.s32.totalorder %s96, %s98
      %p105 = scmp.eq.s32.totalorder %s41, 1
      %p106 = por %p104, %p105
      %p107 = scmp.ne.s32.totalorder %s98, %s99
      %p108 = scmp.eq.s32.totalorder %s41, 0
      %p109 = por %p107, %p108
      %p110 = scmp.ne.s32.totalorder %s98, %s99
      %p111 = scmp.eq.s32.totalorder %s42, 1
      %p112 = por %p110, %p111
      %p114 = scmp.ne.s32.totalorder %s99, %s113
      %p115 = scmp.eq.s32.totalorder %s42, 0
      %p116 = por %p114, %p115
      %s118 = sadd.s32 %s117, 1
      %p121 = scmp.eq.s32.totalorder %s36, 1
      %p122 = scmp.ne.s32.totalorder %s117, %s119
      %p123 = scmp.eq.s32.totalorder %s36, 0
      %p124 = por %p122, %p123
      %p125 = scmp.ne.s32.totalorder %s117, %s119
      %p126 = scmp.eq.s32.totalorder %s41, 1
      %p127 = por %p125, %p126
      %p128 = scmp.ne.s32.totalorder %s119, %s120
      %p129 = scmp.eq.s32.totalorder %s41, 0
      %p130 = por %p128, %p129
      %p131 = scmp.ne.s32.totalorder %s119, %s120
      %p132 = scmp.eq.s32.totalorder %s42, 1
      %p133 = por %p131, %p132
      %p135 = scmp.ne.s32.totalorder %s120, %s134
      %p136 = scmp.eq.s32.totalorder %s42, 0
      %p137 = por %p135, %p136
      %s139 = sadd.s32 %s138, 1
      %p142 = scmp.eq.s32.totalorder %s36, 1
      %p143 = scmp.ne.s32.totalorder %s138, %s140
      %p144 = scmp.eq.s32.totalorder %s36, 0
      %p145 = por %p143, %p144
      %p146 = scmp.ne.s32.totalorder %s138, %s140
      %p147 = scmp.eq.s32.totalorder %s41, 1
      %p148 = por %p146, %p147
      %p149 = scmp.ne.s32.totalorder %s140, %s141
      %p150 = scmp.eq.s32.totalorder %s41, 0
      %p151 = por %p149, %p150
      %p152 = scmp.ne.s32.totalorder %s140, %s141
      %p153 = scmp.eq.s32.totalorder %s42, 1
      %p154 = por %p152, %p153
      %p156 = scmp.ne.s32.totalorder %s141, %s155
      %p157 = scmp.eq.s32.totalorder %s42, 0
      %p158 = por %p156, %p157
      %s160 = sadd.s32 %s159, 1
      %p163 = scmp.eq.s32.totalorder %s36, 1
      %p164 = scmp.ne.s32.totalorder %s159, %s161
      %p165 = scmp.eq.s32.totalorder %s36, 0
      %p166 = por %p164, %p165
      %p167 = scmp.ne.s32.totalorder %s159, %s161
      %p168 = scmp.eq.s32.totalorder %s41, 1
      %p169 = por %p167, %p168
      %p170 = scmp.ne.s32.totalorder %s161, %s162
      %p171 = scmp.eq.s32.totalorder %s41, 0
      %p172 = por %p170, %p171
      %p173 = scmp.ne.s32.totalorder %s161, %s162
      %p174 = scmp.eq.s32.totalorder %s42, 1
      %p175 = por %p173, %p174
      %p177 = scmp.ne.s32.totalorder %s162, %s176
      %p178 = scmp.eq.s32.totalorder %s42, 0
      %p179 = por %p177, %p178
      %s181 = sadd.s32 %s180, 1
      %p184 = scmp.eq.s32.totalorder %s36, 1
      %p185 = scmp.ne.s32.totalorder %s180, %s182
      %p186 = scmp.eq.s32.totalorder %s36, 0
      %p187 = por %p185, %p186
      %p188 = scmp.ne.s32.totalorder %s180, %s182
      %p189 = scmp.eq.s32.totalorder %s41, 1
      %p190 = por %p188, %p189
      %p191 = scmp.ne.s32.totalorder %s182, %s183
      %p192 = scmp.eq.s32.totalorder %s41, 0
      %p193 = por %p191, %p192
      %p194 = scmp.ne.s32.totalorder %s182, %s183
      %p195 = scmp.eq.s32.totalorder %s42, 1
      %p196 = por %p194, %p195
      %p198 = scmp.ne.s32.totalorder %s183, %s197
      %p199 = scmp.eq.s32.totalorder %s42, 0
      %p200 = por %p198, %p199
      %s202 = sadd.s32 %s201, 1
      %p205 = scmp.eq.s32.totalorder %s36, 1
      %p206 = scmp.ne.s32.totalorder %s201, %s203
      %p207 = scmp.eq.s32.totalorder %s36, 0
      %p208 = por %p206, %p207
      %p209 = scmp.ne.s32.totalorder %s201, %s203
      %p210 = scmp.eq.s32.totalorder %s41, 1
      %p211 = por %p209, %p210
      %p212 = scmp.ne.s32.totalorder %s203, %s204
      %p213 = scmp.eq.s32.totalorder %s41, 0
      %p214 = por %p212, %p213
      %p215 = scmp.ne.s32.totalorder %s203, %s204
      %p216 = scmp.eq.s32.totalorder %s42, 1
      %p217 = por %p215, %p216
      %p219 = scmp.ne.s32.totalorder %s204, %s218
      %p220 = scmp.eq.s32.totalorder %s42, 0
      %p221 = por %p219, %p220
      %s223 = sadd.s32 %s222, 1
      %p226 = scmp.eq.s32.totalorder %s36, 1
      %p227 = scmp.ne.s32.totalorder %s222, %s224
      %p228 = scmp.eq.s32.totalorder %s36, 0
      %p229 = por %p227, %p228
      %p230 = scmp.ne.s32.totalorder %s222, %s224
      %p231 = scmp.eq.s32.totalorder %s41, 1
      %p232 = por %p230, %p231
      %p233 = scmp.ne.s32.totalorder %s224, %s225
      %p234 = scmp.eq.s32.totalorder %s41, 0
      %p235 = por %p233, %p234
      %p236 = scmp.ne.s32.totalorder %s224, %s225
      %p237 = scmp.eq.s32.totalorder %s42, 1
      %p238 = por %p236, %p237
      %p240 = scmp.ne.s32.totalorder %s225, %s239
      %p241 = scmp.eq.s32.totalorder %s42, 0
      %p242 = por %p240, %p241
      %s244 = sadd.s32 %s243, 1
      %p247 = scmp.eq.s32.totalorder %s36, 1
      %p248 = scmp.ne.s32.totalorder %s243, %s245
      %p249 = scmp.eq.s32.totalorder %s36, 0
      %p250 = por %p248, %p249
      %p251 = scmp.ne.s32.totalorder %s243, %s245
      %p252 = scmp.eq.s32.totalorder %s41, 1
      %p253 = por %p251, %p252
      %p254 = scmp.ne.s32.totalorder %s245, %s246
      %p255 = scmp.eq.s32.totalorder %s41, 0
      %p256 = por %p254, %p255
      %p257 = scmp.ne.s32.totalorder %s245, %s246
      %p258 = scmp.eq.s32.totalorder %s42, 1
      %p259 = por %p257, %p258
      %p261 = scmp.ne.s32.totalorder %s246, %s260
      %p262 = scmp.eq.s32.totalorder %s42, 0
      %p263 = por %p261, %p262
      %s265 = sadd.s32 %s264, 1
      %p268 = scmp.eq.s32.totalorder %s36, 1
      %p269 = scmp.ne.s32.totalorder %s264, %s266
      %p270 = scmp.eq.s32.totalorder %s36, 0
      %p271 = por %p269, %p270
      %p272 = scmp.ne.s32.totalorder %s264, %s266
      %p273 = scmp.eq.s32.totalorder %s41, 1
      %p274 = por %p272, %p273
      %p275 = scmp.ne.s32.totalorder %s266, %s267
      %p276 = scmp.eq.s32.totalorder %s41, 0
      %p277 = por %p275, %p276
      %p278 = scmp.ne.s32.totalorder %s266, %s267
      %p279 = scmp.eq.s32.totalorder %s42, 1
      %p280 = por %p278, %p279
      %p282 = scmp.ne.s32.totalorder %s267, %s281
      %p283 = scmp.eq.s32.totalorder %s42, 0
      %p284 = por %p282, %p283
      %s286 = sadd.s32 %s285, 1
      %p289 = scmp.eq.s32.totalorder %s36, 1
      %p290 = scmp.ne.s32.totalorder %s285, %s287
      %p291 = scmp.eq.s32.totalorder %s36, 0
      %p292 = por %p290, %p291
      %p293 = scmp.ne.s32.totalorder %s285, %s287
      %p294 = scmp.eq.s32.totalorder %s41, 1
      %p295 = por %p293, %p294
      %p296 = scmp.ne.s32.totalorder %s287, %s288
      %p297 = scmp.eq.s32.totalorder %s41, 0
      %p298 = por %p296, %p297
      %p299 = scmp.ne.s32.totalorder %s287, %s288
      %p300 = scmp.eq.s32.totalorder %s42, 1
      %p301 = por %p299, %p300
      %p303 = scmp.ne.s32.totalorder %s288, %s302
      %p304 = scmp.eq.s32.totalorder %s42, 0
      %p305 = por %p303, %p304
      %s307 = sadd.s32 %s306, 1
      %p310 = scmp.eq.s32.totalorder %s36, 1
      %p311 = scmp.ne.s32.totalorder %s306, %s308
      %p312 = scmp.eq.s32.totalorder %s36, 0
      %p313 = por %p311, %p312
      %p314 = scmp.ne.s32.totalorder %s306, %s308
      %p315 = scmp.eq.s32.totalorder %s41, 1
      %p316 = por %p314, %p315
      %p317 = scmp.ne.s32.totalorder %s308, %s309
      %p318 = scmp.eq.s32.totalorder %s41, 0
      %p319 = por %p317, %p318
      %p320 = scmp.ne.s32.totalorder %s308, %s309
      %p321 = scmp.eq.s32.totalorder %s42, 1
      %p322 = por %p320, %p321
      %p324 = scmp.ne.s32.totalorder %s309, %s323
      %p325 = scmp.eq.s32.totalorder %s42, 0
      %p326 = por %p324, %p325
      %s328 = sadd.s32 %s327, 1
      %p331 = scmp.eq.s32.totalorder %s36, 1
      %p332 = scmp.ne.s32.totalorder %s327, %s329
      %p333 = scmp.eq.s32.totalorder %s36, 0
      %p334 = por %p332, %p333
      %p335 = scmp.ne.s32.totalorder %s327, %s329
      %p336 = scmp.eq.s32.totalorder %s41, 1
      %p337 = por %p335, %p336
      %p338 = scmp.ne.s32.totalorder %s329, %s330
      %p339 = scmp.eq.s32.totalorder %s41, 0
      %p340 = por %p338, %p339
      %p341 = scmp.ne.s32.totalorder %s329, %s330
      %p342 = scmp.eq.s32.totalorder %s42, 1
      %p343 = por %p341, %p342
      %p345 = scmp.ne.s32.totalorder %s330, %s344
      %p346 = scmp.eq.s32.totalorder %s42, 0
      %p347 = por %p345, %p346
      %s348 = ssub.s32 %s36, %s43
      %p349 = scmp.eq.s32.totalorder %s348, 0
      %s351 = sadd.s32 %s350, 1
      %s352 = scalar_select %p349, %s350, %s351
      %p355 = pneg %p349
      %p356 = scmp.eq.s32.totalorder %s36, 1
      %p357 = por %p355, %p356
      %p358 = scmp.ne.s32.totalorder %s350, %s353
      %p359 = scmp.eq.s32.totalorder %s36, 0
      %p360 = por %p358, %p359
      %p361 = scmp.ne.s32.totalorder %s350, %s353
      %p362 = scmp.eq.s32.totalorder %s41, 1
      %p363 = por %p361, %p362
      %p364 = scmp.ne.s32.totalorder %s353, %s354
      %p365 = scmp.eq.s32.totalorder %s41, 0
      %p366 = por %p364, %p365
      %p367 = scmp.ne.s32.totalorder %s353, %s354
      %p368 = scmp.eq.s32.totalorder %s42, 1
      %p369 = por %p367, %p368
      %p371 = scmp.ne.s32.totalorder %s354, %s370
      %p372 = scmp.eq.s32.totalorder %s42, 0
      %p373 = por %p371, %p372
      %s374 = ssub.s32 %s36, %s43
      %p375 = scmp.eq.s32.totalorder %s374, 0
      %s377 = sadd.s32 %s376, 1
      %s378 = scalar_select %p375, %s376, %s377
      %p381 = pneg %p375
      %p382 = scmp.eq.s32.totalorder %s36, 1
      %p383 = por %p381, %p382
      %p384 = scmp.ne.s32.totalorder %s376, %s379
      %p385 = scmp.eq.s32.totalorder %s36, 0
      %p386 = por %p384, %p385
      %p387 = scmp.ne.s32.totalorder %s376, %s379
      %p388 = scmp.eq.s32.totalorder %s41, 1
      %p389 = por %p387, %p388
      %p390 = scmp.ne.s32.totalorder %s379, %s380
      %p391 = scmp.eq.s32.totalorder %s41, 0
      %p392 = por %p390, %p391
      %p393 = scmp.ne.s32.totalorder %s379, %s380
      %p394 = scmp.eq.s32.totalorder %s42, 1
      %p395 = por %p393, %p394
      %p397 = scmp.ne.s32.totalorder %s380, %s396
      %p398 = scmp.eq.s32.totalorder %s42, 0
      %p399 = por %p397, %p398
      %p400 = scmp.le.s32.totalorder 1, %s36
      %p401 = scmp.lt.s32.totalorder %s36, 3
      %p402 = pnand %p400, %p401
      %p403 = pneg %p402
      // Predicated region
      $region9: #{tpu_custom_call.1} parent=5 // pred_check
        _
      $region10: #{tpu_custom_call.1} parent=5 // pred_check_branch
        %405 = sbr.rel (%p402) target = $region12
      $region11: #{tpu_custom_call.1} parent=5 // pred_region
        %s406 = ssub.s32 %s36, 1
        // Predicated region
        $region13: #{tpu_custom_call.1} parent=11 // pred_check
          %p407 = pneg %p109
        $region14: #{tpu_custom_call.1} parent=11 // pred_check_branch
          %409 = sbr.rel (%p407) target = $region16
        $region15: #{tpu_custom_call.1} parent=11 // pred_region
          _
        $region16: #{tpu_custom_call.1} parent=11 // pred_fallthru
          _
        // Predicated region
        $region17: #{tpu_custom_call.1} parent=11 // pred_check
          %p410 = pneg %p130
        $region18: #{tpu_custom_call.1} parent=11 // pred_check_branch
          %412 = sbr.rel (%p410) target = $region20
        $region19: #{tpu_custom_call.1} parent=11 // pred_region
          _
        $region20: #{tpu_custom_call.1} parent=11 // pred_fallthru
          _
        // Predicated region
        $region21: #{tpu_custom_call.1} parent=11 // pred_check
          %p413 = pneg %p151
        $region22: #{tpu_custom_call.1} parent=11 // pred_check_branch
          %415 = sbr.rel (%p413) target = $region24
        $region23: #{tpu_custom_call.1} parent=11 // pred_region
          %s417 = ssub.s32 512, 512
          %418 = vsyncadd [#allocation6], %s417
          %s419 = sshll.u32 [#allocation7], 4
          %s420 = int_to_ptr.vmem [resolvable:$true] %s419
          %425 = dma.hbm_to_vmem [thread:$0]  %s4, 512, %s420, [#allocation6], 128, 128, 8
        $region24: #{tpu_custom_call.1} parent=11 // pred_fallthru
          _
        // Predicated region
        $region25: #{tpu_custom_call.1} parent=11 // pred_check
          %p426 = pneg %p172
        $region26: #{tpu_custom_call.1} parent=11 // pred_check_branch
          %428 = sbr.rel (%p426) target = $region28
        $region27: #{tpu_custom_call.1} parent=11 // pred_region
          _
        $region28: #{tpu_custom_call.1} parent=11 // pred_fallthru
          _
        // Predicated region
        $region29: #{tpu_custom_call.1} parent=11 // pred_check
          %p429 = pneg %p193
        $region30: #{tpu_custom_call.1} parent=11 // pred_check_branch
          %431 = sbr.rel (%p429) target = $region32
        $region31: #{tpu_custom_call.1} parent=11 // pred_region
          %s433 = ssub.s32 512, 512
          %434 = vsyncadd [#allocation9], %s433
          %s435 = sshll.u32 [#allocation8], 4
          %s436 = int_to_ptr.vmem [resolvable:$true] %s435
          %441 = dma.hbm_to_vmem [thread:$0]  %s6, 512, %s436, [#allocation9], 128, 128, 8
        $region32: #{tpu_custom_call.1} parent=11 // pred_fallthru
          _
        // Predicated region
        $region33: #{tpu_custom_call.1} parent=11 // pred_check
          %p442 = pneg %p214
        $region34: #{tpu_custom_call.1} parent=11 // pred_check_branch
          %444 = sbr.rel (%p442) target = $region36
        $region35: #{tpu_custom_call.1} parent=11 // pred_region
          _
        $region36: #{tpu_custom_call.1} parent=11 // pred_fallthru
          _
        // Predicated region
        $region37: #{tpu_custom_call.1} parent=11 // pred_check
          %p445 = pneg %p235
        $region38: #{tpu_custom_call.1} parent=11 // pred_check_branch
          %447 = sbr.rel (%p445) target = $region40
        $region39: #{tpu_custom_call.1} parent=11 // pred_region
          %s449 = ssub.s32 512, 512
          %450 = vsyncadd [#allocation9], %s449
          %s451 = sshll.u32 [#allocation10], 4
          %s452 = int_to_ptr.vmem [resolvable:$true] %s451
          %457 = dma.hbm_to_vmem [thread:$0]  %s8, 512, %s452, [#allocation9], 128, 128, 8
        $region40: #{tpu_custom_call.1} parent=11 // pred_fallthru
          _
        // Predicated region
        $region41: #{tpu_custom_call.1} parent=11 // pred_check
          %p458 = pneg %p256
        $region42: #{tpu_custom_call.1} parent=11 // pred_check_branch
          %460 = sbr.rel (%p458) target = $region44
        $region43: #{tpu_custom_call.1} parent=11 // pred_region
          _
        $region44: #{tpu_custom_call.1} parent=11 // pred_fallthru
          _
        // Predicated region
        $region45: #{tpu_custom_call.1} parent=11 // pred_check
          %p461 = pneg %p277
        $region46: #{tpu_custom_call.1} parent=11 // pred_check_branch
          %463 = sbr.rel (%p461) target = $region48
        $region47: #{tpu_custom_call.1} parent=11 // pred_region
          %s465 = ssub.s32 512, 512
          %466 = vsyncadd [#allocation12], %s465
          %s467 = sshll.u32 [#allocation11], 4
          %s468 = int_to_ptr.vmem [resolvable:$true] %s467
          %473 = dma.hbm_to_vmem [thread:$0]  %s10, 512, %s468, [#allocation12], 128, 128, 8
        $region48: #{tpu_custom_call.1} parent=11 // pred_fallthru
          _
        // Predicated region
        $region49: #{tpu_custom_call.1} parent=11 // pred_check
          %p474 = pneg %p298
        $region50: #{tpu_custom_call.1} parent=11 // pred_check_branch
          %476 = sbr.rel (%p474) target = $region52
        $region51: #{tpu_custom_call.1} parent=11 // pred_region
          _
        $region52: #{tpu_custom_call.1} parent=11 // pred_fallthru
          _
        // Predicated region
        $region53: #{tpu_custom_call.1} parent=11 // pred_check
          %p477 = pneg %p319
        $region54: #{tpu_custom_call.1} parent=11 // pred_check_branch
          %479 = sbr.rel (%p477) target = $region56
        $region55: #{tpu_custom_call.1} parent=11 // pred_region
          %s481 = ssub.s32 512, 512
          %482 = vsyncadd [#allocation12], %s481
          %s483 = sshll.u32 [#allocation13], 4
          %s484 = int_to_ptr.vmem [resolvable:$true] %s483
          %489 = dma.hbm_to_vmem [thread:$0]  %s12, 512, %s484, [#allocation12], 128, 128, 8
        $region56: #{tpu_custom_call.1} parent=11 // pred_fallthru
          _
        // Predicated region
        $region57: #{tpu_custom_call.1} parent=11 // pred_check
          %p490 = pneg %p340
        $region58: #{tpu_custom_call.1} parent=11 // pred_check_branch
          %492 = sbr.rel (%p490) target = $region60
        $region59: #{tpu_custom_call.1} parent=11 // pred_region
          _
        $region60: #{tpu_custom_call.1} parent=11 // pred_fallthru
          _
      $region12: #{tpu_custom_call.1} parent=5 // pred_fallthru
        _
      %p493 = scmp.lt.s32.totalorder %s36, 2
      // Predicated region
      $region61: #{tpu_custom_call.1} parent=5 // pred_check
        %p494 = pneg %p493
      $region62: #{tpu_custom_call.1} parent=5 // pred_check_branch
        %496 = sbr.rel (%p494) target = $region64
      $region63: #{tpu_custom_call.1} parent=5 // pred_region
        // Predicated region
        $region65: #{tpu_custom_call.1} parent=63 // pred_check
          %p497 = pneg %p56
        $region66: #{tpu_custom_call.1} parent=63 // pred_check_branch
          %499 = sbr.rel (%p497) target = $region68
        $region67: #{tpu_custom_call.1} parent=63 // pred_region
          %s500 = sand.u32 %s46, 1
          %s501 = scalar_lea.sflag [#allocation3], %s500
          %s502 = sand.u32 %s46, 1
          %s503 = smul.addr %s502, 8
          %s504 = scalar_lea.vmem [#allocation2], %s503
          %s506 = ssub.s32 128, 128
          %507 = vsyncadd %s501, %s506
          %s508 = smul.addr %s36, 128
          %s509 = scalar_lea.hbm %s0, %s508
          %s511 = sshll.u32 %s504, 4
          %s512 = int_to_ptr.vmem [resolvable:$true] %s511
          %514 = dma.hbm_to_vmem [thread:$0]  %s509, 128, %s512, %s501
        $region68: #{tpu_custom_call.1} parent=63 // pred_fallthru
          _
        // Predicated region
        $region69: #{tpu_custom_call.1} parent=63 // pred_check
          %p515 = pneg %p82
        $region70: #{tpu_custom_call.1} parent=63 // pred_check_branch
          %517 = sbr.rel (%p515) target = $region72
        $region71: #{tpu_custom_call.1} parent=63 // pred_region
          %s518 = sand.u32 %s36, 1
          %s519 = scalar_lea.sflag [#allocation6], %s518
          %s520 = sand.u32 %s72, 1
          %s521 = smul.addr %s520, 8
          %s522 = scalar_lea.vmem [#allocation5], %s521
          %s524 = ssub.s32 128, 128
          %525 = vsyncadd %s519, %s524
          %s526 = smul.addr %s36, 128
          %s527 = scalar_lea.hbm %s1, %s526
          %s529 = sshll.u32 %s522, 4
          %s530 = int_to_ptr.vmem [resolvable:$true] %s529
          %532 = dma.hbm_to_vmem [thread:$0]  %s527, 128, %s530, %s519
        $region72: #{tpu_custom_call.1} parent=63 // pred_fallthru
          _
      $region64: #{tpu_custom_call.1} parent=5 // pred_fallthru
        _
      %p533 = scmp.le.s32.totalorder 1, %s36
      %p534 = scmp.lt.s32.totalorder %s36, 3
      %p535 = pnand %p533, %p534
      %p536 = pneg %p535
      // Predicated region
      $region73: #{tpu_custom_call.1} parent=5 // pred_check
        _
      $region74: #{tpu_custom_call.1} parent=5 // pred_check_branch
        %538 = sbr.rel (%p535) target = $region76
      $region75: #{tpu_custom_call.1} parent=5 // pred_region
        %s539 = ssub.s32 %s36, 1
        %s540 = sand.u32 %s49, 1
        %s541 = scalar_lea.sflag [#allocation3], %s540
        %s542 = sand.u32 %s49, 1
        %s543 = smul.addr %s542, 8
        %s544 = scalar_lea.vmem [#allocation2], %s543
        // Predicated region
        $region77: #{tpu_custom_call.1} parent=75 // pred_check
          %p545 = pneg %p62
        $region78: #{tpu_custom_call.1} parent=75 // pred_check_branch
          %547 = sbr.rel (%p545) target = $region80
        $region79: #{tpu_custom_call.1} parent=75 // pred_region
          %548 = dma.done %s541, 128
        $region80: #{tpu_custom_call.1} parent=75 // pred_fallthru
          _
        %s549 = sand.u32 %s41, 1
        %s550 = scalar_lea.sflag [#allocation6], %s549
        %s551 = sand.u32 %s75, 1
        %s552 = smul.addr %s551, 8
        %s553 = scalar_lea.vmem [#allocation5], %s552
        // Predicated region
        $region81: #{tpu_custom_call.1} parent=75 // pred_check
          %p554 = pneg %p88
        $region82: #{tpu_custom_call.1} parent=75 // pred_check_branch
          %556 = sbr.rel (%p554) target = $region84
        $region83: #{tpu_custom_call.1} parent=75 // pred_region
          %557 = dma.done %s550, 128
        $region84: #{tpu_custom_call.1} parent=75 // pred_fallthru
          _
        // Predicated region
        $region85: #{tpu_custom_call.1} parent=75 // pred_check
          %p558 = pneg %p151
        $region86: #{tpu_custom_call.1} parent=75 // pred_check_branch
          %560 = sbr.rel (%p558) target = $region88
        $region87: #{tpu_custom_call.1} parent=75 // pred_region
          %561 = dma.done [#allocation6], 512
        $region88: #{tpu_custom_call.1} parent=75 // pred_fallthru
          _
        // Predicated region
        $region89: #{tpu_custom_call.1} parent=75 // pred_check
          %p562 = pneg %p193
        $region90: #{tpu_custom_call.1} parent=75 // pred_check_branch
          %564 = sbr.rel (%p562) target = $region92
        $region91: #{tpu_custom_call.1} parent=75 // pred_region
          %565 = dma.done [#allocation9], 512
        $region92: #{tpu_custom_call.1} parent=75 // pred_fallthru
          _
        // Predicated region
        $region93: #{tpu_custom_call.1} parent=75 // pred_check
          %p566 = pneg %p235
        $region94: #{tpu_custom_call.1} parent=75 // pred_check_branch
          %568 = sbr.rel (%p566) target = $region96
        $region95: #{tpu_custom_call.1} parent=75 // pred_region
          %569 = dma.done [#allocation9], 512
        $region96: #{tpu_custom_call.1} parent=75 // pred_fallthru
          _
        // Predicated region
        $region97: #{tpu_custom_call.1} parent=75 // pred_check
          %p570 = pneg %p277
        $region98: #{tpu_custom_call.1} parent=75 // pred_check_branch
          %572 = sbr.rel (%p570) target = $region100
        $region99: #{tpu_custom_call.1} parent=75 // pred_region
          %573 = dma.done [#allocation12], 512
        $region100: #{tpu_custom_call.1} parent=75 // pred_fallthru
          _
        // Predicated region
        $region101: #{tpu_custom_call.1} parent=75 // pred_check
          %p574 = pneg %p319
        $region102: #{tpu_custom_call.1} parent=75 // pred_check_branch
          %576 = sbr.rel (%p574) target = $region104
        $region103: #{tpu_custom_call.1} parent=75 // pred_region
          %577 = dma.done [#allocation12], 512
        $region104: #{tpu_custom_call.1} parent=75 // pred_fallthru
          _
        %s578 = sand.u32 %s49, 1
        %s579 = scalar_lea.sflag [#allocation3], %s578
        %s580 = sand.u32 %s49, 1
        %s581 = smul.addr %s580, 8
        %s582 = scalar_lea.vmem [#allocation2], %s581
        %p583 = pneg %p62
        %p584 = pneg %p59
        %s585 = sand.u32 %s41, 1
        %s586 = scalar_lea.sflag [#allocation6], %s585
        %s587 = sand.u32 %s75, 1
        %s588 = smul.addr %s587, 8
        %s589 = scalar_lea.vmem [#allocation5], %s588
        %p590 = pneg %p88
        %p591 = pneg %p85
        %p592 = pneg %p109
        %p593 = pneg %p106
        %p594 = pneg %p130
        %p595 = pneg %p127
        %p596 = pneg %p151
        %p597 = pneg %p148
        %p598 = pneg %p172
        %p599 = pneg %p169
        %p600 = pneg %p193
        %p601 = pneg %p190
        %p602 = pneg %p214
        %p603 = pneg %p211
        %p604 = pneg %p235
        %p605 = pneg %p232
        %p606 = pneg %p256
        %p607 = pneg %p253
        %p608 = pneg %p277
        %p609 = pneg %p274
        %p610 = pneg %p298
        %p611 = pneg %p295
        %p612 = pneg %p319
        %p613 = pneg %p316
        %p614 = pneg %p340
        %p615 = pneg %p337
        %p616 = pneg %p366
        %p617 = pneg %p363
        %s618 = sand.u32 %s353, 1
        %s619 = scalar_lea.sflag [#allocation4], %s618
        %s620 = sand.u32 %s353, 1
        %s621 = smul.addr %s620, 8
        %s622 = scalar_lea.vmem [#allocation14], %s621
        %p623 = pneg %p392
        %p624 = pneg %p389
        %s625 = sand.u32 %s379, 1
        %s626 = scalar_lea.sflag [#allocation16], %s625
        %s627 = sand.u32 %s379, 1
        %s628 = smul.addr %s627, 8
        %s629 = scalar_lea.vmem [#allocation15], %s628
        %v630 = vld [vmem:[%s2] sm:$0x1]
        %v631 = vld [vmem:[%s3] sm:$0x1]
        %v632 = vld [vmem:[%s544] sm:$0xff]
        %v633 = vld [vmem:[%s553] sm:$0xff]
        %vm634 = vcmask 261120
        %v635 = vsel %vm634, %v632, 0.0
        %636 = vadd.xlane.f32.xlu0 %v635
        %v637 = vpop.xlane.xlu0 %636
        %v638 = vrcp.pop 32.0
        %v639 = vmul.f32 %v637, %v638
        %v640 = vsub.f32 %v632, %v639
        %v641 = vmul.f32 %v640, %v640
        %v642 = vsel %vm634, %v641, 0.0
        %643 = vadd.xlane.f32.xlu0 %v642
        %v644 = vpop.xlane.xlu0 %643
        %v645 = vmul.f32 %v644, %v638
        %v646 = vadd.f32 %v645, 1e-05
        %v647 = vrsqrt.pop %v646
        %v648 = vmul.f32 %v640, %v647
        %v650 = vlaneseq
        %v651 = vshrl.u32 %v650, 7
        %v652 = vsub.s32 0, %v651
        %v653 = vrot.slane %v630, %v652
        %v655 = vmul.f32 %v648, %v653
        %v657 = vlaneseq
        %v658 = vshrl.u32 %v657, 7
        %v659 = vsub.s32 0, %v658
        %v660 = vrot.slane %v631, %v659
        %v662 = vadd.f32 %v655, %v660
        %v663 = vsel %vm634, %v633, 0.0
        %664 = vadd.xlane.f32.xlu0 %v663
        %v665 = vpop.xlane.xlu0 %664
        %v666 = vmul.f32 %v665, %v638
        %v667 = vsub.f32 %v633, %v666
        %v668 = vmul.f32 %v667, %v667
        %v669 = vsel %vm634, %v668, 0.0
        %670 = vadd.xlane.f32.xlu0 %v669
        %v671 = vpop.xlane.xlu0 %670
        %v672 = vmul.f32 %v671, %v638
        %v673 = vadd.f32 %v672, 1e-05
        %v674 = vrsqrt.pop %v673
        %v675 = vmul.f32 %v667, %v674
        %v676 = vmul.f32 %v675, %v653
        %v677 = vadd.f32 %v676, %v660
        %v678 = vld [vmem:[#allocation7] sm:$0xff]
        %v679 = vld [vmem:[#allocation7 + $0x8] sm:$0xff]
        %v680 = vld [vmem:[#allocation7 + $0x10] sm:$0xff]
        %v681 = vld [vmem:[#allocation7 + $0x18] sm:$0xff]
        %v682 = vld [vmem:[%s5] sm:$0x1]
        %v684 = vlaneseq
        %v685 = vshrl.u32 %v684, 7
        %v686 = vsub.s32 0, %v685
        %v687 = vrot.slane %v682, %v686
        %v690 = vsel %vm634, %v662, 0
        %692 = vmatprep.subr.mxu0 0.0
        %693 = vmatpush1.msra.mxu0 0.0
        %694 = vmatprep.subr.mxu0 0.0
        %695 = vmatpush1.msra.mxu0 0.0
        %696 = vmatprep.subr.mxu0 0.0
        %697 = vmatpush1.msra.mxu0 0.0
        %698 = vmatprep.subr.mxu0 0.0
        %699 = vmatpush1.msra.mxu0 0.0
        %700 = vmatprep.subr.mxu0 0.0
        %701 = vmatpush1.msra.mxu0 0.0
        %702 = vmatprep.subr.mxu0 0.0
        %703 = vmatpush1.msra.mxu0 0.0
        %704 = vmatprep.subr.mxu0 0.0
        %705 = vmatpush1.msra.mxu0 0.0
        %706 = vmatprep.subr.mxu0 0.0
        %707 = vmatpush1.msra.mxu0 0.0
        %708 = vmatprep.subr.mxu0 0.0
        %709 = vmatpush1.msra.mxu0 0.0
        %710 = vmatprep.subr.mxu0 0.0
        %711 = vmatpush1.msra.mxu0 0.0
        %712 = vmatprep.subr.mxu0 0.0
        %713 = vmatpush1.msra.mxu0 0.0
        %714 = vmatprep.subr.mxu0 0.0
        %715 = vmatpush1.msra.mxu0 0.0
        %716 = vmatprep.subr.mxu0 0.0
        %717 = vmatpush1.msra.mxu0 %v681
        %718 = vmatprep.subr.mxu0 0.0
        %719 = vmatpush1.msra.mxu0 %v680
        %720 = vmatprep.subr.mxu0 0.0
        %721 = vmatpush1.msra.mxu0 %v679
        %722 = vmatprep.subr.mxu0 0.0
        %723 = vmatpush1.msra.mxu0 %v678
        %724 = vmatprep.subr.mxu0 0.0
        %725 = vmatpush2.msra.mxu0 0.0
        %726 = vmatprep.subr.mxu0 0.0
        %727 = vmatpush2.msra.mxu0 0.0
        %728 = vmatprep.subr.mxu0 0.0
        %729 = vmatpush2.msra.mxu0 0.0
        %730 = vmatprep.subr.mxu0 0.0
        %731 = vmatpush2.msra.mxu0 0.0
        %732 = vmatprep.subr.mxu0 0.0
        %733 = vmatpush2.msra.mxu0 0.0
        %734 = vmatprep.subr.mxu0 0.0
        %735 = vmatpush2.msra.mxu0 0.0
        %736 = vmatprep.subr.mxu0 0.0
        %737 = vmatpush2.msra.mxu0 0.0
        %738 = vmatprep.subr.mxu0 0.0
        %739 = vmatpush2.msra.mxu0 0.0
        %740 = vmatprep.subr.mxu0 0.0
        %741 = vmatpush2.msra.mxu0 0.0
        %742 = vmatprep.subr.mxu0 0.0
        %743 = vmatpush2.msra.mxu0 0.0
        %744 = vmatprep.subr.mxu0 0.0
        %745 = vmatpush2.msra.mxu0 0.0
        %746 = vmatprep.subr.mxu0 0.0
        %747 = vmatpush2.msra.mxu0 0.0
        %748 = vmatprep.subr.mxu0 0.0
        %749 = vmatpush2.msra.mxu0 0.0
        %750 = vmatprep.subr.mxu0 0.0
        %751 = vmatpush2.msra.mxu0 0.0
        %752 = vmatprep.subr.mxu0 0.0
        %753 = vmatpush2.msra.mxu0 0.0
        %754 = vmatprep.subr.mxu0 0.0
        %755 = vmatpush2.msra.mxu0 0.0
        %756 = vmatprep.mubr.f32.mxu0 0.0
        %757 = vmatmul.mubr.f32.gmra.mxu0 %v690
        %v758 = vpop.f32.mrf.mxu0
        %v759 = vadd.f32 %v687, %v758
        %v760 = vpop.f32.mrf.mxu0
        %761 = vdwg.mxu0
        %v762 = vld [vmem:[#allocation8] sm:$0xff]
        %v763 = vld [vmem:[#allocation8 + $0x8] sm:$0xff]
        %v764 = vld [vmem:[#allocation8 + $0x10] sm:$0xff]
        %v765 = vld [vmem:[#allocation8 + $0x18] sm:$0xff]
        %v766 = vld [vmem:[%s7] sm:$0x1]
        %v768 = vlaneseq
        %v769 = vshrl.u32 %v768, 7
        %v770 = vsub.s32 0, %v769
        %v771 = vrot.slane %v766, %v770
        %v774 = vsel %vm634, %v677, 0
        %776 = vmatprep.subr.mxu0 0.0
        %777 = vmatpush1.msra.mxu0 0.0
        %778 = vmatprep.subr.mxu0 0.0
        %779 = vmatpush1.msra.mxu0 0.0
        %780 = vmatprep.subr.mxu0 0.0
        %781 = vmatpush1.msra.mxu0 0.0
        %782 = vmatprep.subr.mxu0 0.0
        %783 = vmatpush1.msra.mxu0 0.0
        %784 = vmatprep.subr.mxu0 0.0
        %785 = vmatpush1.msra.mxu0 0.0
        %786 = vmatprep.subr.mxu0 0.0
        %787 = vmatpush1.msra.mxu0 0.0
        %788 = vmatprep.subr.mxu0 0.0
        %789 = vmatpush1.msra.mxu0 0.0
        %790 = vmatprep.subr.mxu0 0.0
        %791 = vmatpush1.msra.mxu0 0.0
        %792 = vmatprep.subr.mxu0 0.0
        %793 = vmatpush1.msra.mxu0 0.0
        %794 = vmatprep.subr.mxu0 0.0
        %795 = vmatpush1.msra.mxu0 0.0
        %796 = vmatprep.subr.mxu0 0.0
        %797 = vmatpush1.msra.mxu0 0.0
        %798 = vmatprep.subr.mxu0 0.0
        %799 = vmatpush1.msra.mxu0 0.0
        %800 = vmatprep.subr.mxu0 0.0
        %801 = vmatpush1.msra.mxu0 %v765
        %802 = vmatprep.subr.mxu0 0.0
        %803 = vmatpush1.msra.mxu0 %v764
        %804 = vmatprep.subr.mxu0 0.0
        %805 = vmatpush1.msra.mxu0 %v763
        %806 = vmatprep.subr.mxu0 0.0
        %807 = vmatpush1.msra.mxu0 %v762
        %808 = vmatprep.subr.mxu0 0.0
        %809 = vmatpush2.msra.mxu0 0.0
        %810 = vmatprep.subr.mxu0 0.0
        %811 = vmatpush2.msra.mxu0 0.0
        %812 = vmatprep.subr.mxu0 0.0
        %813 = vmatpush2.msra.mxu0 0.0
        %814 = vmatprep.subr.mxu0 0.0
        %815 = vmatpush2.msra.mxu0 0.0
        %816 = vmatprep.subr.mxu0 0.0
        %817 = vmatpush2.msra.mxu0 0.0
        %818 = vmatprep.subr.mxu0 0.0
        %819 = vmatpush2.msra.mxu0 0.0
        %820 = vmatprep.subr.mxu0 0.0
        %821 = vmatpush2.msra.mxu0 0.0
        %822 = vmatprep.subr.mxu0 0.0
        %823 = vmatpush2.msra.mxu0 0.0
        %824 = vmatprep.subr.mxu0 0.0
        %825 = vmatpush2.msra.mxu0 0.0
        %826 = vmatprep.subr.mxu0 0.0
        %827 = vmatpush2.msra.mxu0 0.0
        %828 = vmatprep.subr.mxu0 0.0
        %829 = vmatpush2.msra.mxu0 0.0
        %830 = vmatprep.subr.mxu0 0.0
        %831 = vmatpush2.msra.mxu0 0.0
        %832 = vmatprep.subr.mxu0 0.0
        %833 = vmatpush2.msra.mxu0 0.0
        %834 = vmatprep.subr.mxu0 0.0
        %835 = vmatpush2.msra.mxu0 0.0
        %836 = vmatprep.subr.mxu0 0.0
        %837 = vmatpush2.msra.mxu0 0.0
        %838 = vmatprep.subr.mxu0 0.0
        %839 = vmatpush2.msra.mxu0 0.0
        %840 = vmatprep.mubr.f32.mxu0 0.0
        %841 = vmatmul.mubr.f32.gmra.mxu0 %v774
        %v842 = vpop.f32.mrf.mxu0
        %v843 = vadd.f32 %v771, %v842
        %v844 = vpop.f32.mrf.mxu0
        %845 = vdwg.mxu0
        %v846 = vld [vmem:[#allocation10] sm:$0xff]
        %v847 = vld [vmem:[#allocation10 + $0x8] sm:$0xff]
        %v848 = vld [vmem:[#allocation10 + $0x10] sm:$0xff]
        %v849 = vld [vmem:[#allocation10 + $0x18] sm:$0xff]
        %v850 = vld [vmem:[%s9] sm:$0x1]
        %v852 = vlaneseq
        %v853 = vshrl.u32 %v852, 7
        %v854 = vsub.s32 0, %v853
        %v855 = vrot.slane %v850, %v854
        %857 = vmatprep.subr.mxu0 0.0
        %858 = vmatpush1.msra.mxu0 0.0
        %859 = vmatprep.subr.mxu0 0.0
        %860 = vmatpush1.msra.mxu0 0.0
        %861 = vmatprep.subr.mxu0 0.0
        %862 = vmatpush1.msra.mxu0 0.0
        %863 = vmatprep.subr.mxu0 0.0
        %864 = vmatpush1.msra.mxu0 0.0
        %865 = vmatprep.subr.mxu0 0.0
        %866 = vmatpush1.msra.mxu0 0.0
        %867 = vmatprep.subr.mxu0 0.0
        %868 = vmatpush1.msra.mxu0 0.0
        %869 = vmatprep.subr.mxu0 0.0
        %870 = vmatpush1.msra.mxu0 0.0
        %871 = vmatprep.subr.mxu0 0.0
        %872 = vmatpush1.msra.mxu0 0.0
        %873 = vmatprep.subr.mxu0 0.0
        %874 = vmatpush1.msra.mxu0 0.0
        %875 = vmatprep.subr.mxu0 0.0
        %876 = vmatpush1.msra.mxu0 0.0
        %877 = vmatprep.subr.mxu0 0.0
        %878 = vmatpush1.msra.mxu0 0.0
        %879 = vmatprep.subr.mxu0 0.0
        %880 = vmatpush1.msra.mxu0 0.0
        %881 = vmatprep.subr.mxu0 0.0
        %882 = vmatpush1.msra.mxu0 %v849
        %883 = vmatprep.subr.mxu0 0.0
        %884 = vmatpush1.msra.mxu0 %v848
        %885 = vmatprep.subr.mxu0 0.0
        %886 = vmatpush1.msra.mxu0 %v847
        %887 = vmatprep.subr.mxu0 0.0
        %888 = vmatpush1.msra.mxu0 %v846
        %889 = vmatprep.subr.mxu0 0.0
        %890 = vmatpush2.msra.mxu0 0.0
        %891 = vmatprep.subr.mxu0 0.0
        %892 = vmatpush2.msra.mxu0 0.0
        %893 = vmatprep.subr.mxu0 0.0
        %894 = vmatpush2.msra.mxu0 0.0
        %895 = vmatprep.subr.mxu0 0.0
        %896 = vmatpush2.msra.mxu0 0.0
        %897 = vmatprep.subr.mxu0 0.0
        %898 = vmatpush2.msra.mxu0 0.0
        %899 = vmatprep.subr.mxu0 0.0
        %900 = vmatpush2.msra.mxu0 0.0
        %901 = vmatprep.subr.mxu0 0.0
        %902 = vmatpush2.msra.mxu0 0.0
        %903 = vmatprep.subr.mxu0 0.0
        %904 = vmatpush2.msra.mxu0 0.0
        %905 = vmatprep.subr.mxu0 0.0
        %906 = vmatpush2.msra.mxu0 0.0
        %907 = vmatprep.subr.mxu0 0.0
        %908 = vmatpush2.msra.mxu0 0.0
        %909 = vmatprep.subr.mxu0 0.0
        %910 = vmatpush2.msra.mxu0 0.0
        %911 = vmatprep.subr.mxu0 0.0
        %912 = vmatpush2.msra.mxu0 0.0
        %913 = vmatprep.subr.mxu0 0.0
        %914 = vmatpush2.msra.mxu0 0.0
        %915 = vmatprep.subr.mxu0 0.0
        %916 = vmatpush2.msra.mxu0 0.0
        %917 = vmatprep.subr.mxu0 0.0
        %918 = vmatpush2.msra.mxu0 0.0
        %919 = vmatprep.subr.mxu0 0.0
        %920 = vmatpush2.msra.mxu0 0.0
        %921 = vmatprep.mubr.f32.mxu0 0.0
        %922 = vmatmul.mubr.f32.gmra.mxu0 %v774
        %v923 = vpop.f32.mrf.mxu0
        %v924 = vadd.f32 %v855, %v923
        %v925 = vpop.f32.mrf.mxu0
        %926 = vdwg.mxu0
        %vm927 = vcmask 64512
        %v929 = vsel %vm927, %v759, 0
        %v932 = vsel %vm927, %v843, 0
        %934 = vmatprep.subr.mxu0 0.0
        %935 = vmatpush1.xpose.msra.mxu0 0.0
        %936 = vmatprep.subr.mxu0 0.0
        %937 = vmatpush1.xpose.msra.mxu0 0.0
        %938 = vmatprep.subr.mxu0 0.0
        %939 = vmatpush1.xpose.msra.mxu0 0.0
        %940 = vmatprep.subr.mxu0 0.0
        %941 = vmatpush1.xpose.msra.mxu0 0.0
        %942 = vmatprep.subr.mxu0 0.0
        %943 = vmatpush1.xpose.msra.mxu0 0.0
        %944 = vmatprep.subr.mxu0 0.0
        %945 = vmatpush1.xpose.msra.mxu0 0.0
        %946 = vmatprep.subr.mxu0 0.0
        %947 = vmatpush1.xpose.msra.mxu0 0.0
        %948 = vmatprep.subr.mxu0 0.0
        %949 = vmatpush1.xpose.msra.mxu0 0.0
        %950 = vmatprep.subr.mxu0 0.0
        %951 = vmatpush1.xpose.msra.mxu0 0.0
        %952 = vmatprep.subr.mxu0 0.0
        %953 = vmatpush1.xpose.msra.mxu0 0.0
        %954 = vmatprep.subr.mxu0 0.0
        %955 = vmatpush1.xpose.msra.mxu0 0.0
        %956 = vmatprep.subr.mxu0 0.0
        %957 = vmatpush1.xpose.msra.mxu0 0.0
        %958 = vmatprep.subr.mxu0 0.0
        %959 = vmatpush1.xpose.msra.mxu0 0.0
        %960 = vmatprep.subr.mxu0 0.0
        %961 = vmatpush1.xpose.msra.mxu0 0.0
        %962 = vmatprep.subr.mxu0 0.0
        %963 = vmatpush1.xpose.msra.mxu0 0.0
        %964 = vmatprep.subr.mxu0 0.0
        %965 = vmatpush1.xpose.msra.mxu0 %v932
        %966 = vmatprep.subr.mxu0 0.0
        %967 = vmatpush2.xpose.msra.mxu0 0.0
        %968 = vmatprep.subr.mxu0 0.0
        %969 = vmatpush2.xpose.msra.mxu0 0.0
        %970 = vmatprep.subr.mxu0 0.0
        %971 = vmatpush2.xpose.msra.mxu0 0.0
        %972 = vmatprep.subr.mxu0 0.0
        %973 = vmatpush2.xpose.msra.mxu0 0.0
        %974 = vmatprep.subr.mxu0 0.0
        %975 = vmatpush2.xpose.msra.mxu0 0.0
        %976 = vmatprep.subr.mxu0 0.0
        %977 = vmatpush2.xpose.msra.mxu0 0.0
        %978 = vmatprep.subr.mxu0 0.0
        %979 = vmatpush2.xpose.msra.mxu0 0.0
        %980 = vmatprep.subr.mxu0 0.0
        %981 = vmatpush2.xpose.msra.mxu0 0.0
        %982 = vmatprep.subr.mxu0 0.0
        %983 = vmatpush2.xpose.msra.mxu0 0.0
        %984 = vmatprep.subr.mxu0 0.0
        %985 = vmatpush2.xpose.msra.mxu0 0.0
        %986 = vmatprep.subr.mxu0 0.0
        %987 = vmatpush2.xpose.msra.mxu0 0.0
        %988 = vmatprep.subr.mxu0 0.0
        %989 = vmatpush2.xpose.msra.mxu0 0.0
        %990 = vmatprep.subr.mxu0 0.0
        %991 = vmatpush2.xpose.msra.mxu0 0.0
        %992 = vmatprep.subr.mxu0 0.0
        %993 = vmatpush2.xpose.msra.mxu0 0.0
        %994 = vmatprep.subr.mxu0 0.0
        %995 = vmatpush2.xpose.msra.mxu0 0.0
        %996 = vmatprep.subr.mxu0 0.0
        %997 = vmatpush2.xpose.msra.mxu0 0.0
        %998 = vmatprep.mubr.f32.mxu0 0.0
        %999 = vmatmul.mubr.f32.gmra.mxu0 %v929
        %v1000 = vpop.f32.mrf.mxu0
        %v1001 = vadd.f32 0.0, %v1000
        %v1002 = vpop.f32.mrf.mxu0
        %1003 = vdwg.mxu0
        %v1004 = vmul.f32 %v1001, 0.35355338
        %v1005 = vsel %vm927, %v1004, -inf
        %1006 = vmax.xlane.f32.xlu0 %v1005
        %v1007 = vpop.xlane.xlu0 %1006
        %v1008 = vsub.f32 %v1004, %v1007
        %v1009 = vmul.f32 %v1008, 1.442695
        %v1010 = vpow.pop %v1009
        %v1011 = vsel %vm927, %v1010, 0.0
        %1012 = vadd.xlane.f32.xlu0 %v1011
        %v1013 = vpop.xlane.xlu0 %1012
        %v1014 = vrcp.pop %v1013
        %v1015 = vmul.f32 %v1010, %v1014
        %v1017 = vsel %vm927, %v1015, 0
        %1019 = vmatprep.subr.mxu0 0.0
        %1020 = vmatpush1.msra.mxu0 0.0
        %1021 = vmatprep.subr.mxu0 0.0
        %1022 = vmatpush1.msra.mxu0 0.0
        %1023 = vmatprep.subr.mxu0 0.0
        %1024 = vmatpush1.msra.mxu0 0.0
        %1025 = vmatprep.subr.mxu0 0.0
        %1026 = vmatpush1.msra.mxu0 0.0
        %1027 = vmatprep.subr.mxu0 0.0
        %1028 = vmatpush1.msra.mxu0 0.0
        %1029 = vmatprep.subr.mxu0 0.0
        %1030 = vmatpush1.msra.mxu0 0.0
        %1031 = vmatprep.subr.mxu0 0.0
        %1032 = vmatpush1.msra.mxu0 0.0
        %1033 = vmatprep.subr.mxu0 0.0
        %1034 = vmatpush1.msra.mxu0 0.0
        %1035 = vmatprep.subr.mxu0 0.0
        %1036 = vmatpush1.msra.mxu0 0.0
        %1037 = vmatprep.subr.mxu0 0.0
        %1038 = vmatpush1.msra.mxu0 0.0
        %1039 = vmatprep.subr.mxu0 0.0
        %1040 = vmatpush1.msra.mxu0 0.0
        %1041 = vmatprep.subr.mxu0 0.0
        %1042 = vmatpush1.msra.mxu0 0.0
        %1043 = vmatprep.subr.mxu0 0.0
        %1044 = vmatpush1.msra.mxu0 0.0
        %1045 = vmatprep.subr.mxu0 0.0
        %1046 = vmatpush1.msra.mxu0 0.0
        %1047 = vmatprep.subr.mxu0 0.0
        %1048 = vmatpush1.msra.mxu0 0.0
        %1049 = vmatprep.subr.mxu0 0.0
        %1050 = vmatpush1.msra.mxu0 %v924
        %1051 = vmatprep.subr.mxu0 0.0
        %1052 = vmatpush2.msra.mxu0 0.0
        %1053 = vmatprep.subr.mxu0 0.0
        %1054 = vmatpush2.msra.mxu0 0.0
        %1055 = vmatprep.subr.mxu0 0.0
        %1056 = vmatpush2.msra.mxu0 0.0
        %1057 = vmatprep.subr.mxu0 0.0
        %1058 = vmatpush2.msra.mxu0 0.0
        %1059 = vmatprep.subr.mxu0 0.0
        %1060 = vmatpush2.msra.mxu0 0.0
        %1061 = vmatprep.subr.mxu0 0.0
        %1062 = vmatpush2.msra.mxu0 0.0
        %1063 = vmatprep.subr.mxu0 0.0
        %1064 = vmatpush2.msra.mxu0 0.0
        %1065 = vmatprep.subr.mxu0 0.0
        %1066 = vmatpush2.msra.mxu0 0.0
        %1067 = vmatprep.subr.mxu0 0.0
        %1068 = vmatpush2.msra.mxu0 0.0
        %1069 = vmatprep.subr.mxu0 0.0
        %1070 = vmatpush2.msra.mxu0 0.0
        %1071 = vmatprep.subr.mxu0 0.0
        %1072 = vmatpush2.msra.mxu0 0.0
        %1073 = vmatprep.subr.mxu0 0.0
        %1074 = vmatpush2.msra.mxu0 0.0
        %1075 = vmatprep.subr.mxu0 0.0
        %1076 = vmatpush2.msra.mxu0 0.0
        %1077 = vmatprep.subr.mxu0 0.0
        %1078 = vmatpush2.msra.mxu0 0.0
        %1079 = vmatprep.subr.mxu0 0.0
        %1080 = vmatpush2.msra.mxu0 0.0
        %1081 = vmatprep.subr.mxu0 0.0
        %1082 = vmatpush2.msra.mxu0 0.0
        %1083 = vmatprep.mubr.f32.mxu0 0.0
        %1084 = vmatmul.mubr.f32.gmra.mxu0 %v1017
        %v1085 = vpop.f32.mrf.mxu0
        %v1086 = vadd.f32 0.0, %v1085
        %v1087 = vpop.f32.mrf.mxu0
        %1088 = vdwg.mxu0
        %1089 = vrot.lane.b32.xlu0 %v759, 120
        %v1090 = vpop.permute.xlu0 %1089
        %1091 = vrot.lane.b32.xlu0 %v843, 120
        %v1092 = vpop.permute.xlu0 %1091
        %v1093 = vsel %vm927, %v1090, 0
        %v1095 = vsel %vm927, %v1092, 0
        %1097 = vmatprep.subr.mxu0 0.0
        %1098 = vmatpush1.xpose.msra.mxu0 0.0
        %1099 = vmatprep.subr.mxu0 0.0
        %1100 = vmatpush1.xpose.msra.mxu0 0.0
        %1101 = vmatprep.subr.mxu0 0.0
        %1102 = vmatpush1.xpose.msra.mxu0 0.0
        %1103 = vmatprep.subr.mxu0 0.0
        %1104 = vmatpush1.xpose.msra.mxu0 0.0
        %1105 = vmatprep.subr.mxu0 0.0
        %1106 = vmatpush1.xpose.msra.mxu0 0.0
        %1107 = vmatprep.subr.mxu0 0.0
        %1108 = vmatpush1.xpose.msra.mxu0 0.0
        %1109 = vmatprep.subr.mxu0 0.0
        %1110 = vmatpush1.xpose.msra.mxu0 0.0
        %1111 = vmatprep.subr.mxu0 0.0
        %1112 = vmatpush1.xpose.msra.mxu0 0.0
        %1113 = vmatprep.subr.mxu0 0.0
        %1114 = vmatpush1.xpose.msra.mxu0 0.0
        %1115 = vmatprep.subr.mxu0 0.0
        %1116 = vmatpush1.xpose.msra.mxu0 0.0
        %1117 = vmatprep.subr.mxu0 0.0
        %1118 = vmatpush1.xpose.msra.mxu0 0.0
        %1119 = vmatprep.subr.mxu0 0.0
        %1120 = vmatpush1.xpose.msra.mxu0 0.0
        %1121 = vmatprep.subr.mxu0 0.0
        %1122 = vmatpush1.xpose.msra.mxu0 0.0
        %1123 = vmatprep.subr.mxu0 0.0
        %1124 = vmatpush1.xpose.msra.mxu0 0.0
        %1125 = vmatprep.subr.mxu0 0.0
        %1126 = vmatpush1.xpose.msra.mxu0 0.0
        %1127 = vmatprep.subr.mxu0 0.0
        %1128 = vmatpush1.xpose.msra.mxu0 %v1095
        %1129 = vmatprep.subr.mxu0 0.0
        %1130 = vmatpush2.xpose.msra.mxu0 0.0
        %1131 = vmatprep.subr.mxu0 0.0
        %1132 = vmatpush2.xpose.msra.mxu0 0.0
        %1133 = vmatprep.subr.mxu0 0.0
        %1134 = vmatpush2.xpose.msra.mxu0 0.0
        %1135 = vmatprep.subr.mxu0 0.0
        %1136 = vmatpush2.xpose.msra.mxu0 0.0
        %1137 = vmatprep.subr.mxu0 0.0
        %1138 = vmatpush2.xpose.msra.mxu0 0.0
        %1139 = vmatprep.subr.mxu0 0.0
        %1140 = vmatpush2.xpose.msra.mxu0 0.0
        %1141 = vmatprep.subr.mxu0 0.0
        %1142 = vmatpush2.xpose.msra.mxu0 0.0
        %1143 = vmatprep.subr.mxu0 0.0
        %1144 = vmatpush2.xpose.msra.mxu0 0.0
        %1145 = vmatprep.subr.mxu0 0.0
        %1146 = vmatpush2.xpose.msra.mxu0 0.0
        %1147 = vmatprep.subr.mxu0 0.0
        %1148 = vmatpush2.xpose.msra.mxu0 0.0
        %1149 = vmatprep.subr.mxu0 0.0
        %1150 = vmatpush2.xpose.msra.mxu0 0.0
        %1151 = vmatprep.subr.mxu0 0.0
        %1152 = vmatpush2.xpose.msra.mxu0 0.0
        %1153 = vmatprep.subr.mxu0 0.0
        %1154 = vmatpush2.xpose.msra.mxu0 0.0
        %1155 = vmatprep.subr.mxu0 0.0
        %1156 = vmatpush2.xpose.msra.mxu0 0.0
        %1157 = vmatprep.subr.mxu0 0.0
        %1158 = vmatpush2.xpose.msra.mxu0 0.0
        %1159 = vmatprep.subr.mxu0 0.0
        %1160 = vmatpush2.xpose.msra.mxu0 0.0
        %1161 = vmatprep.mubr.f32.mxu0 0.0
        %1162 = vmatmul.mubr.f32.gmra.mxu0 %v1093
        %v1163 = vpop.f32.mrf.mxu0
        %v1164 = vadd.f32 0.0, %v1163
        %v1165 = vpop.f32.mrf.mxu0
        %1166 = vdwg.mxu0
        %v1167 = vmul.f32 %v1164, 0.35355338
        %v1168 = vsel %vm927, %v1167, -inf
        %1169 = vmax.xlane.f32.xlu0 %v1168
        %v1170 = vpop.xlane.xlu0 %1169
        %v1171 = vsub.f32 %v1167, %v1170
        %v1172 = vmul.f32 %v1171, 1.442695
        %v1173 = vpow.pop %v1172
        %v1174 = vsel %vm927, %v1173, 0.0
        %1175 = vadd.xlane.f32.xlu0 %v1174
        %v1176 = vpop.xlane.xlu0 %1175
        %v1177 = vrcp.pop %v1176
        %v1178 = vmul.f32 %v1173, %v1177
        %v1179 = vadd.f32 %v1015, %v1178
        %1181 = vrot.lane.b32.xlu0 %v924, 120
        %v1182 = vpop.permute.xlu0 %1181
        %v1185 = vsel %vm927, %v1178, 0
        %1187 = vmatprep.subr.mxu0 0.0
        %1188 = vmatpush1.msra.mxu0 0.0
        %1189 = vmatprep.subr.mxu0 0.0
        %1190 = vmatpush1.msra.mxu0 0.0
        %1191 = vmatprep.subr.mxu0 0.0
        %1192 = vmatpush1.msra.mxu0 0.0
        %1193 = vmatprep.subr.mxu0 0.0
        %1194 = vmatpush1.msra.mxu0 0.0
        %1195 = vmatprep.subr.mxu0 0.0
        %1196 = vmatpush1.msra.mxu0 0.0
        %1197 = vmatprep.subr.mxu0 0.0
        %1198 = vmatpush1.msra.mxu0 0.0
        %1199 = vmatprep.subr.mxu0 0.0
        %1200 = vmatpush1.msra.mxu0 0.0
        %1201 = vmatprep.subr.mxu0 0.0
        %1202 = vmatpush1.msra.mxu0 0.0
        %1203 = vmatprep.subr.mxu0 0.0
        %1204 = vmatpush1.msra.mxu0 0.0
        %1205 = vmatprep.subr.mxu0 0.0
        %1206 = vmatpush1.msra.mxu0 0.0
        %1207 = vmatprep.subr.mxu0 0.0
        %1208 = vmatpush1.msra.mxu0 0.0
        %1209 = vmatprep.subr.mxu0 0.0
        %1210 = vmatpush1.msra.mxu0 0.0
        %1211 = vmatprep.subr.mxu0 0.0
        %1212 = vmatpush1.msra.mxu0 0.0
        %1213 = vmatprep.subr.mxu0 0.0
        %1214 = vmatpush1.msra.mxu0 0.0
        %1215 = vmatprep.subr.mxu0 0.0
        %1216 = vmatpush1.msra.mxu0 0.0
        %1217 = vmatprep.subr.mxu0 0.0
        %1218 = vmatpush1.msra.mxu0 %v1182
        %1219 = vmatprep.subr.mxu0 0.0
        %1220 = vmatpush2.msra.mxu0 0.0
        %1221 = vmatprep.subr.mxu0 0.0
        %1222 = vmatpush2.msra.mxu0 0.0
        %1223 = vmatprep.subr.mxu0 0.0
        %1224 = vmatpush2.msra.mxu0 0.0
        %1225 = vmatprep.subr.mxu0 0.0
        %1226 = vmatpush2.msra.mxu0 0.0
        %1227 = vmatprep.subr.mxu0 0.0
        %1228 = vmatpush2.msra.mxu0 0.0
        %1229 = vmatprep.subr.mxu0 0.0
        %1230 = vmatpush2.msra.mxu0 0.0
        %1231 = vmatprep.subr.mxu0 0.0
        %1232 = vmatpush2.msra.mxu0 0.0
        %1233 = vmatprep.subr.mxu0 0.0
        %1234 = vmatpush2.msra.mxu0 0.0
        %1235 = vmatprep.subr.mxu0 0.0
        %1236 = vmatpush2.msra.mxu0 0.0
        %1237 = vmatprep.subr.mxu0 0.0
        %1238 = vmatpush2.msra.mxu0 0.0
        %1239 = vmatprep.subr.mxu0 0.0
        %1240 = vmatpush2.msra.mxu0 0.0
        %1241 = vmatprep.subr.mxu0 0.0
        %1242 = vmatpush2.msra.mxu0 0.0
        %1243 = vmatprep.subr.mxu0 0.0
        %1244 = vmatpush2.msra.mxu0 0.0
        %1245 = vmatprep.subr.mxu0 0.0
        %1246 = vmatpush2.msra.mxu0 0.0
        %1247 = vmatprep.subr.mxu0 0.0
        %1248 = vmatpush2.msra.mxu0 0.0
        %1249 = vmatprep.subr.mxu0 0.0
        %1250 = vmatpush2.msra.mxu0 0.0
        %1251 = vmatprep.mubr.f32.mxu0 0.0
        %1252 = vmatmul.mubr.f32.gmra.mxu0 %v1185
        %v1253 = vpop.f32.mrf.mxu0
        %v1254 = vadd.f32 0.0, %v1253
        %v1255 = vpop.f32.mrf.mxu0
        %1256 = vdwg.mxu0
        %1257 = vrot.lane.b32.xlu0 %v759, 112
        %v1258 = vpop.permute.xlu0 %1257
        %1259 = vrot.lane.b32.xlu0 %v843, 112
        %v1260 = vpop.permute.xlu0 %1259
        %v1261 = vsel %vm927, %v1258, 0
        %v1263 = vsel %vm927, %v1260, 0
        %1265 = vmatprep.subr.mxu0 0.0
        %1266 = vmatpush1.xpose.msra.mxu0 0.0
        %1267 = vmatprep.subr.mxu0 0.0
        %1268 = vmatpush1.xpose.msra.mxu0 0.0
        %1269 = vmatprep.subr.mxu0 0.0
        %1270 = vmatpush1.xpose.msra.mxu0 0.0
        %1271 = vmatprep.subr.mxu0 0.0
        %1272 = vmatpush1.xpose.msra.mxu0 0.0
        %1273 = vmatprep.subr.mxu0 0.0
        %1274 = vmatpush1.xpose.msra.mxu0 0.0
        %1275 = vmatprep.subr.mxu0 0.0
        %1276 = vmatpush1.xpose.msra.mxu0 0.0
        %1277 = vmatprep.subr.mxu0 0.0
        %1278 = vmatpush1.xpose.msra.mxu0 0.0
        %1279 = vmatprep.subr.mxu0 0.0
        %1280 = vmatpush1.xpose.msra.mxu0 0.0
        %1281 = vmatprep.subr.mxu0 0.0
        %1282 = vmatpush1.xpose.msra.mxu0 0.0
        %1283 = vmatprep.subr.mxu0 0.0
        %1284 = vmatpush1.xpose.msra.mxu0 0.0
        %1285 = vmatprep.subr.mxu0 0.0
        %1286 = vmatpush1.xpose.msra.mxu0 0.0
        %1287 = vmatprep.subr.mxu0 0.0
        %1288 = vmatpush1.xpose.msra.mxu0 0.0
        %1289 = vmatprep.subr.mxu0 0.0
        %1290 = vmatpush1.xpose.msra.mxu0 0.0
        %1291 = vmatprep.subr.mxu0 0.0
        %1292 = vmatpush1.xpose.msra.mxu0 0.0
        %1293 = vmatprep.subr.mxu0 0.0
        %1294 = vmatpush1.xpose.msra.mxu0 0.0
        %1295 = vmatprep.subr.mxu0 0.0
        %1296 = vmatpush1.xpose.msra.mxu0 %v1263
        %1297 = vmatprep.subr.mxu0 0.0
        %1298 = vmatpush2.xpose.msra.mxu0 0.0
        %1299 = vmatprep.subr.mxu0 0.0
        %1300 = vmatpush2.xpose.msra.mxu0 0.0
        %1301 = vmatprep.subr.mxu0 0.0
        %1302 = vmatpush2.xpose.msra.mxu0 0.0
        %1303 = vmatprep.subr.mxu0 0.0
        %1304 = vmatpush2.xpose.msra.mxu0 0.0
        %1305 = vmatprep.subr.mxu0 0.0
        %1306 = vmatpush2.xpose.msra.mxu0 0.0
        %1307 = vmatprep.subr.mxu0 0.0
        %1308 = vmatpush2.xpose.msra.mxu0 0.0
        %1309 = vmatprep.subr.mxu0 0.0
        %1310 = vmatpush2.xpose.msra.mxu0 0.0
        %1311 = vmatprep.subr.mxu0 0.0
        %1312 = vmatpush2.xpose.msra.mxu0 0.0
        %1313 = vmatprep.subr.mxu0 0.0
        %1314 = vmatpush2.xpose.msra.mxu0 0.0
        %1315 = vmatprep.subr.mxu0 0.0
        %1316 = vmatpush2.xpose.msra.mxu0 0.0
        %1317 = vmatprep.subr.mxu0 0.0
        %1318 = vmatpush2.xpose.msra.mxu0 0.0
        %1319 = vmatprep.subr.mxu0 0.0
        %1320 = vmatpush2.xpose.msra.mxu0 0.0
        %1321 = vmatprep.subr.mxu0 0.0
        %1322 = vmatpush2.xpose.msra.mxu0 0.0
        %1323 = vmatprep.subr.mxu0 0.0
        %1324 = vmatpush2.xpose.msra.mxu0 0.0
        %1325 = vmatprep.subr.mxu0 0.0
        %1326 = vmatpush2.xpose.msra.mxu0 0.0
        %1327 = vmatprep.subr.mxu0 0.0
        %1328 = vmatpush2.xpose.msra.mxu0 0.0
        %1329 = vmatprep.mubr.f32.mxu0 0.0
        %1330 = vmatmul.mubr.f32.gmra.mxu0 %v1261
        %v1331 = vpop.f32.mrf.mxu0
        %v1332 = vadd.f32 0.0, %v1331
        %v1333 = vpop.f32.mrf.mxu0
        %1334 = vdwg.mxu0
        %v1335 = vmul.f32 %v1332, 0.35355338
        %v1336 = vsel %vm927, %v1335, -inf
        %1337 = vmax.xlane.f32.xlu0 %v1336
        %v1338 = vpop.xlane.xlu0 %1337
        %v1339 = vsub.f32 %v1335, %v1338
        %v1340 = vmul.f32 %v1339, 1.442695
        %v1341 = vpow.pop %v1340
        %v1342 = vsel %vm927, %v1341, 0.0
        %1343 = vadd.xlane.f32.xlu0 %v1342
        %v1344 = vpop.xlane.xlu0 %1343
        %v1345 = vrcp.pop %v1344
        %v1346 = vmul.f32 %v1341, %v1345
        %v1347 = vadd.f32 %v1179, %v1346
        %1348 = vrot.lane.b32.xlu0 %v924, 112
        %v1349 = vpop.permute.xlu0 %1348
        %v1352 = vsel %vm927, %v1346, 0
        %1354 = vmatprep.subr.mxu0 0.0
        %1355 = vmatpush1.msra.mxu0 0.0
        %1356 = vmatprep.subr.mxu0 0.0
        %1357 = vmatpush1.msra.mxu0 0.0
        %1358 = vmatprep.subr.mxu0 0.0
        %1359 = vmatpush1.msra.mxu0 0.0
        %1360 = vmatprep.subr.mxu0 0.0
        %1361 = vmatpush1.msra.mxu0 0.0
        %1362 = vmatprep.subr.mxu0 0.0
        %1363 = vmatpush1.msra.mxu0 0.0
        %1364 = vmatprep.subr.mxu0 0.0
        %1365 = vmatpush1.msra.mxu0 0.0
        %1366 = vmatprep.subr.mxu0 0.0
        %1367 = vmatpush1.msra.mxu0 0.0
        %1368 = vmatprep.subr.mxu0 0.0
        %1369 = vmatpush1.msra.mxu0 0.0
        %1370 = vmatprep.subr.mxu0 0.0
        %1371 = vmatpush1.msra.mxu0 0.0
        %1372 = vmatprep.subr.mxu0 0.0
        %1373 = vmatpush1.msra.mxu0 0.0
        %1374 = vmatprep.subr.mxu0 0.0
        %1375 = vmatpush1.msra.mxu0 0.0
        %1376 = vmatprep.subr.mxu0 0.0
        %1377 = vmatpush1.msra.mxu0 0.0
        %1378 = vmatprep.subr.mxu0 0.0
        %1379 = vmatpush1.msra.mxu0 0.0
        %1380 = vmatprep.subr.mxu0 0.0
        %1381 = vmatpush1.msra.mxu0 0.0
        %1382 = vmatprep.subr.mxu0 0.0
        %1383 = vmatpush1.msra.mxu0 0.0
        %1384 = vmatprep.subr.mxu0 0.0
        %1385 = vmatpush1.msra.mxu0 %v1349
        %1386 = vmatprep.subr.mxu0 0.0
        %1387 = vmatpush2.msra.mxu0 0.0
        %1388 = vmatprep.subr.mxu0 0.0
        %1389 = vmatpush2.msra.mxu0 0.0
        %1390 = vmatprep.subr.mxu0 0.0
        %1391 = vmatpush2.msra.mxu0 0.0
        %1392 = vmatprep.subr.mxu0 0.0
        %1393 = vmatpush2.msra.mxu0 0.0
        %1394 = vmatprep.subr.mxu0 0.0
        %1395 = vmatpush2.msra.mxu0 0.0
        %1396 = vmatprep.subr.mxu0 0.0
        %1397 = vmatpush2.msra.mxu0 0.0
        %1398 = vmatprep.subr.mxu0 0.0
        %1399 = vmatpush2.msra.mxu0 0.0
        %1400 = vmatprep.subr.mxu0 0.0
        %1401 = vmatpush2.msra.mxu0 0.0
        %1402 = vmatprep.subr.mxu0 0.0
        %1403 = vmatpush2.msra.mxu0 0.0
        %1404 = vmatprep.subr.mxu0 0.0
        %1405 = vmatpush2.msra.mxu0 0.0
        %1406 = vmatprep.subr.mxu0 0.0
        %1407 = vmatpush2.msra.mxu0 0.0
        %1408 = vmatprep.subr.mxu0 0.0
        %1409 = vmatpush2.msra.mxu0 0.0
        %1410 = vmatprep.subr.mxu0 0.0
        %1411 = vmatpush2.msra.mxu0 0.0
        %1412 = vmatprep.subr.mxu0 0.0
        %1413 = vmatpush2.msra.mxu0 0.0
        %1414 = vmatprep.subr.mxu0 0.0
        %1415 = vmatpush2.msra.mxu0 0.0
        %1416 = vmatprep.subr.mxu0 0.0
        %1417 = vmatpush2.msra.mxu0 0.0
        %1418 = vmatprep.mubr.f32.mxu0 0.0
        %1419 = vmatmul.mubr.f32.gmra.mxu0 %v1352
        %v1420 = vpop.f32.mrf.mxu0
        %v1421 = vadd.f32 0.0, %v1420
        %v1422 = vpop.f32.mrf.mxu0
        %1423 = vdwg.mxu0
        %1424 = vrot.lane.b32.xlu0 %v759, 104
        %v1425 = vpop.permute.xlu0 %1424
        %1426 = vrot.lane.b32.xlu0 %v843, 104
        %v1427 = vpop.permute.xlu0 %1426
        %v1428 = vsel %vm927, %v1425, 0
        %v1430 = vsel %vm927, %v1427, 0
        %1432 = vmatprep.subr.mxu0 0.0
        %1433 = vmatpush1.xpose.msra.mxu0 0.0
        %1434 = vmatprep.subr.mxu0 0.0
        %1435 = vmatpush1.xpose.msra.mxu0 0.0
        %1436 = vmatprep.subr.mxu0 0.0
        %1437 = vmatpush1.xpose.msra.mxu0 0.0
        %1438 = vmatprep.subr.mxu0 0.0
        %1439 = vmatpush1.xpose.msra.mxu0 0.0
        %1440 = vmatprep.subr.mxu0 0.0
        %1441 = vmatpush1.xpose.msra.mxu0 0.0
        %1442 = vmatprep.subr.mxu0 0.0
        %1443 = vmatpush1.xpose.msra.mxu0 0.0
        %1444 = vmatprep.subr.mxu0 0.0
        %1445 = vmatpush1.xpose.msra.mxu0 0.0
        %1446 = vmatprep.subr.mxu0 0.0
        %1447 = vmatpush1.xpose.msra.mxu0 0.0
        %1448 = vmatprep.subr.mxu0 0.0
        %1449 = vmatpush1.xpose.msra.mxu0 0.0
        %1450 = vmatprep.subr.mxu0 0.0
        %1451 = vmatpush1.xpose.msra.mxu0 0.0
        %1452 = vmatprep.subr.mxu0 0.0
        %1453 = vmatpush1.xpose.msra.mxu0 0.0
        %1454 = vmatprep.subr.mxu0 0.0
        %1455 = vmatpush1.xpose.msra.mxu0 0.0
        %1456 = vmatprep.subr.mxu0 0.0
        %1457 = vmatpush1.xpose.msra.mxu0 0.0
        %1458 = vmatprep.subr.mxu0 0.0
        %1459 = vmatpush1.xpose.msra.mxu0 0.0
        %1460 = vmatprep.subr.mxu0 0.0
        %1461 = vmatpush1.xpose.msra.mxu0 0.0
        %1462 = vmatprep.subr.mxu0 0.0
        %1463 = vmatpush1.xpose.msra.mxu0 %v1430
        %1464 = vmatprep.subr.mxu0 0.0
        %1465 = vmatpush2.xpose.msra.mxu0 0.0
        %1466 = vmatprep.subr.mxu0 0.0
        %1467 = vmatpush2.xpose.msra.mxu0 0.0
        %1468 = vmatprep.subr.mxu0 0.0
        %1469 = vmatpush2.xpose.msra.mxu0 0.0
        %1470 = vmatprep.subr.mxu0 0.0
        %1471 = vmatpush2.xpose.msra.mxu0 0.0
        %1472 = vmatprep.subr.mxu0 0.0
        %1473 = vmatpush2.xpose.msra.mxu0 0.0
        %1474 = vmatprep.subr.mxu0 0.0
        %1475 = vmatpush2.xpose.msra.mxu0 0.0
        %1476 = vmatprep.subr.mxu0 0.0
        %1477 = vmatpush2.xpose.msra.mxu0 0.0
        %1478 = vmatprep.subr.mxu0 0.0
        %1479 = vmatpush2.xpose.msra.mxu0 0.0
        %1480 = vmatprep.subr.mxu0 0.0
        %1481 = vmatpush2.xpose.msra.mxu0 0.0
        %1482 = vmatprep.subr.mxu0 0.0
        %1483 = vmatpush2.xpose.msra.mxu0 0.0
        %1484 = vmatprep.subr.mxu0 0.0
        %1485 = vmatpush2.xpose.msra.mxu0 0.0
        %1486 = vmatprep.subr.mxu0 0.0
        %1487 = vmatpush2.xpose.msra.mxu0 0.0
        %1488 = vmatprep.subr.mxu0 0.0
        %1489 = vmatpush2.xpose.msra.mxu0 0.0
        %1490 = vmatprep.subr.mxu0 0.0
        %1491 = vmatpush2.xpose.msra.mxu0 0.0
        %1492 = vmatprep.subr.mxu0 0.0
        %1493 = vmatpush2.xpose.msra.mxu0 0.0
        %1494 = vmatprep.subr.mxu0 0.0
        %1495 = vmatpush2.xpose.msra.mxu0 0.0
        %1496 = vmatprep.mubr.f32.mxu0 0.0
        %1497 = vmatmul.mubr.f32.gmra.mxu0 %v1428
        %v1498 = vpop.f32.mrf.mxu0
        %v1499 = vadd.f32 0.0, %v1498
        %v1500 = vpop.f32.mrf.mxu0
        %1501 = vdwg.mxu0
        %v1502 = vmul.f32 %v1499, 0.35355338
        %v1503 = vsel %vm927, %v1502, -inf
        %1504 = vmax.xlane.f32.xlu0 %v1503
        %v1505 = vpop.xlane.xlu0 %1504
        %v1506 = vsub.f32 %v1502, %v1505
        %v1507 = vmul.f32 %v1506, 1.442695
        %v1508 = vpow.pop %v1507
        %v1509 = vsel %vm927, %v1508, 0.0
        %1510 = vadd.xlane.f32.xlu0 %v1509
        %v1511 = vpop.xlane.xlu0 %1510
        %v1512 = vrcp.pop %v1511
        %v1513 = vmul.f32 %v1508, %v1512
        %v1514 = vadd.f32 %v1347, %v1513
        %1515 = vrot.lane.b32.xlu0 %v924, 104
        %v1516 = vpop.permute.xlu0 %1515
        %v1519 = vsel %vm927, %v1513, 0
        %1521 = vmatprep.subr.mxu0 0.0
        %1522 = vmatpush1.msra.mxu0 0.0
        %1523 = vmatprep.subr.mxu0 0.0
        %1524 = vmatpush1.msra.mxu0 0.0
        %1525 = vmatprep.subr.mxu0 0.0
        %1526 = vmatpush1.msra.mxu0 0.0
        %1527 = vmatprep.subr.mxu0 0.0
        %1528 = vmatpush1.msra.mxu0 0.0
        %1529 = vmatprep.subr.mxu0 0.0
        %1530 = vmatpush1.msra.mxu0 0.0
        %1531 = vmatprep.subr.mxu0 0.0
        %1532 = vmatpush1.msra.mxu0 0.0
        %1533 = vmatprep.subr.mxu0 0.0
        %1534 = vmatpush1.msra.mxu0 0.0
        %1535 = vmatprep.subr.mxu0 0.0
        %1536 = vmatpush1.msra.mxu0 0.0
        %1537 = vmatprep.subr.mxu0 0.0
        %1538 = vmatpush1.msra.mxu0 0.0
        %1539 = vmatprep.subr.mxu0 0.0
        %1540 = vmatpush1.msra.mxu0 0.0
        %1541 = vmatprep.subr.mxu0 0.0
        %1542 = vmatpush1.msra.mxu0 0.0
        %1543 = vmatprep.subr.mxu0 0.0
        %1544 = vmatpush1.msra.mxu0 0.0
        %1545 = vmatprep.subr.mxu0 0.0
        %1546 = vmatpush1.msra.mxu0 0.0
        %1547 = vmatprep.subr.mxu0 0.0
        %1548 = vmatpush1.msra.mxu0 0.0
        %1549 = vmatprep.subr.mxu0 0.0
        %1550 = vmatpush1.msra.mxu0 0.0
        %1551 = vmatprep.subr.mxu0 0.0
        %1552 = vmatpush1.msra.mxu0 %v1516
        %1553 = vmatprep.subr.mxu0 0.0
        %1554 = vmatpush2.msra.mxu0 0.0
        %1555 = vmatprep.subr.mxu0 0.0
        %1556 = vmatpush2.msra.mxu0 0.0
        %1557 = vmatprep.subr.mxu0 0.0
        %1558 = vmatpush2.msra.mxu0 0.0
        %1559 = vmatprep.subr.mxu0 0.0
        %1560 = vmatpush2.msra.mxu0 0.0
        %1561 = vmatprep.subr.mxu0 0.0
        %1562 = vmatpush2.msra.mxu0 0.0
        %1563 = vmatprep.subr.mxu0 0.0
        %1564 = vmatpush2.msra.mxu0 0.0
        %1565 = vmatprep.subr.mxu0 0.0
        %1566 = vmatpush2.msra.mxu0 0.0
        %1567 = vmatprep.subr.mxu0 0.0
        %1568 = vmatpush2.msra.mxu0 0.0
        %1569 = vmatprep.subr.mxu0 0.0
        %1570 = vmatpush2.msra.mxu0 0.0
        %1571 = vmatprep.subr.mxu0 0.0
        %1572 = vmatpush2.msra.mxu0 0.0
        %1573 = vmatprep.subr.mxu0 0.0
        %1574 = vmatpush2.msra.mxu0 0.0
        %1575 = vmatprep.subr.mxu0 0.0
        %1576 = vmatpush2.msra.mxu0 0.0
        %1577 = vmatprep.subr.mxu0 0.0
        %1578 = vmatpush2.msra.mxu0 0.0
        %1579 = vmatprep.subr.mxu0 0.0
        %1580 = vmatpush2.msra.mxu0 0.0
        %1581 = vmatprep.subr.mxu0 0.0
        %1582 = vmatpush2.msra.mxu0 0.0
        %1583 = vmatprep.subr.mxu0 0.0
        %1584 = vmatpush2.msra.mxu0 0.0
        %1585 = vmatprep.mubr.f32.mxu0 0.0
        %1586 = vmatmul.mubr.f32.gmra.mxu0 %v1519
        %v1587 = vpop.f32.mrf.mxu0
        %v1588 = vadd.f32 0.0, %v1587
        %v1589 = vpop.f32.mrf.mxu0
        %1590 = vdwg.mxu0
        %v1591 = vmul.f32 %v1514, 0.25
        %1592 = vst.msk [vmem:[%s629] sm:$0xff] %vm927, %v1591
        %1594 = vrot.lane.b32.xlu0 %v1254, 8
        %v1595 = vpop.permute.xlu0 %1594
        %1598 = vrot.lane.b32.xlu0 %v1421, 16
        %v1599 = vpop.permute.xlu0 %1598
        %1602 = vrot.lane.b32.xlu0 %v1588, 24
        %v1603 = vpop.permute.xlu0 %1602
        %v1605 = vsel %vm927, %v1086, %v1595
        %vm1606 = vcmask 130048
        %v1607 = vsel %vm1606, %v1605, %v1599
        %vm1608 = vcmask 195584
        %v1609 = vsel %vm1608, %v1607, %v1603
        %v1610 = vld [vmem:[#allocation11] sm:$0xff]
        %v1611 = vld [vmem:[#allocation11 + $0x8] sm:$0xff]
        %v1612 = vld [vmem:[#allocation11 + $0x10] sm:$0xff]
        %v1613 = vld [vmem:[#allocation11 + $0x18] sm:$0xff]
        %v1614 = vld [vmem:[%s11] sm:$0x1]
        %v1616 = vlaneseq
        %v1617 = vshrl.u32 %v1616, 7
        %v1618 = vsub.s32 0, %v1617
        %v1619 = vrot.slane %v1614, %v1618
        %v1622 = vsel %vm634, %v1609, 0
        %1624 = vmatprep.subr.mxu0 0.0
        %1625 = vmatpush1.msra.mxu0 0.0
        %1626 = vmatprep.subr.mxu0 0.0
        %1627 = vmatpush1.msra.mxu0 0.0
        %1628 = vmatprep.subr.mxu0 0.0
        %1629 = vmatpush1.msra.mxu0 0.0
        %1630 = vmatprep.subr.mxu0 0.0
        %1631 = vmatpush1.msra.mxu0 0.0
        %1632 = vmatprep.subr.mxu0 0.0
        %1633 = vmatpush1.msra.mxu0 0.0
        %1634 = vmatprep.subr.mxu0 0.0
        %1635 = vmatpush1.msra.mxu0 0.0
        %1636 = vmatprep.subr.mxu0 0.0
        %1637 = vmatpush1.msra.mxu0 0.0
        %1638 = vmatprep.subr.mxu0 0.0
        %1639 = vmatpush1.msra.mxu0 0.0
        %1640 = vmatprep.subr.mxu0 0.0
        %1641 = vmatpush1.msra.mxu0 0.0
        %1642 = vmatprep.subr.mxu0 0.0
        %1643 = vmatpush1.msra.mxu0 0.0
        %1644 = vmatprep.subr.mxu0 0.0
        %1645 = vmatpush1.msra.mxu0 0.0
        %1646 = vmatprep.subr.mxu0 0.0
        %1647 = vmatpush1.msra.mxu0 0.0
        %1648 = vmatprep.subr.mxu0 0.0
        %1649 = vmatpush1.msra.mxu0 %v1613
        %1650 = vmatprep.subr.mxu0 0.0
        %1651 = vmatpush1.msra.mxu0 %v1612
        %1652 = vmatprep.subr.mxu0 0.0
        %1653 = vmatpush1.msra.mxu0 %v1611
        %1654 = vmatprep.subr.mxu0 0.0
        %1655 = vmatpush1.msra.mxu0 %v1610
        %1656 = vmatprep.subr.mxu0 0.0
        %1657 = vmatpush2.msra.mxu0 0.0
        %1658 = vmatprep.subr.mxu0 0.0
        %1659 = vmatpush2.msra.mxu0 0.0
        %1660 = vmatprep.subr.mxu0 0.0
        %1661 = vmatpush2.msra.mxu0 0.0
        %1662 = vmatprep.subr.mxu0 0.0
        %1663 = vmatpush2.msra.mxu0 0.0
        %1664 = vmatprep.subr.mxu0 0.0
        %1665 = vmatpush2.msra.mxu0 0.0
        %1666 = vmatprep.subr.mxu0 0.0
        %1667 = vmatpush2.msra.mxu0 0.0
        %1668 = vmatprep.subr.mxu0 0.0
        %1669 = vmatpush2.msra.mxu0 0.0
        %1670 = vmatprep.subr.mxu0 0.0
        %1671 = vmatpush2.msra.mxu0 0.0
        %1672 = vmatprep.subr.mxu0 0.0
        %1673 = vmatpush2.msra.mxu0 0.0
        %1674 = vmatprep.subr.mxu0 0.0
        %1675 = vmatpush2.msra.mxu0 0.0
        %1676 = vmatprep.subr.mxu0 0.0
        %1677 = vmatpush2.msra.mxu0 0.0
        %1678 = vmatprep.subr.mxu0 0.0
        %1679 = vmatpush2.msra.mxu0 0.0
        %1680 = vmatprep.subr.mxu0 0.0
        %1681 = vmatpush2.msra.mxu0 0.0
        %1682 = vmatprep.subr.mxu0 0.0
        %1683 = vmatpush2.msra.mxu0 0.0
        %1684 = vmatprep.subr.mxu0 0.0
        %1685 = vmatpush2.msra.mxu0 0.0
        %1686 = vmatprep.subr.mxu0 0.0
        %1687 = vmatpush2.msra.mxu0 0.0
        %1688 = vmatprep.mubr.f32.mxu0 0.0
        %1689 = vmatmul.mubr.f32.gmra.mxu0 %v1622
        %v1690 = vpop.f32.mrf.mxu0
        %v1691 = vadd.f32 %v1619, %v1690
        %v1692 = vpop.f32.mrf.mxu0
        %1693 = vdwg.mxu0
        %v1694 = vadd.f32 %v1691, %v632
        %v1695 = vsel %vm634, %v1694, 0.0
        %1696 = vadd.xlane.f32.xlu0 %v1695
        %v1697 = vpop.xlane.xlu0 %1696
        %v1698 = vmul.f32 %v1697, %v638
        %v1699 = vsub.f32 %v1694, %v1698
        %v1700 = vmul.f32 %v1699, %v1699
        %v1701 = vsel %vm634, %v1700, 0.0
        %1702 = vadd.xlane.f32.xlu0 %v1701
        %v1703 = vpop.xlane.xlu0 %1702
        %v1704 = vmul.f32 %v1703, %v638
        %v1705 = vadd.f32 %v1704, 1e-05
        %v1706 = vrsqrt.pop %v1705
        %v1707 = vmul.f32 %v1699, %v1706
        %v1708 = vmul.f32 %v1707, %v653
        %v1709 = vadd.f32 %v1708, %v660
        %v1710 = vld [vmem:[#allocation13] sm:$0xff]
        %v1711 = vld [vmem:[#allocation13 + $0x8] sm:$0xff]
        %v1712 = vld [vmem:[#allocation13 + $0x10] sm:$0xff]
        %v1713 = vld [vmem:[#allocation13 + $0x18] sm:$0xff]
        %v1714 = vld [vmem:[%s13] sm:$0x1]
        %v1716 = vlaneseq
        %v1717 = vshrl.u32 %v1716, 7
        %v1718 = vsub.s32 0, %v1717
        %v1719 = vrot.slane %v1714, %v1718
        %v1722 = vsel %vm634, %v1709, 0
        %1724 = vmatprep.subr.mxu0 0.0
        %1725 = vmatpush1.msra.mxu0 0.0
        %1726 = vmatprep.subr.mxu0 0.0
        %1727 = vmatpush1.msra.mxu0 0.0
        %1728 = vmatprep.subr.mxu0 0.0
        %1729 = vmatpush1.msra.mxu0 0.0
        %1730 = vmatprep.subr.mxu0 0.0
        %1731 = vmatpush1.msra.mxu0 0.0
        %1732 = vmatprep.subr.mxu0 0.0
        %1733 = vmatpush1.msra.mxu0 0.0
        %1734 = vmatprep.subr.mxu0 0.0
        %1735 = vmatpush1.msra.mxu0 0.0
        %1736 = vmatprep.subr.mxu0 0.0
        %1737 = vmatpush1.msra.mxu0 0.0
        %1738 = vmatprep.subr.mxu0 0.0
        %1739 = vmatpush1.msra.mxu0 0.0
        %1740 = vmatprep.subr.mxu0 0.0
        %1741 = vmatpush1.msra.mxu0 0.0
        %1742 = vmatprep.subr.mxu0 0.0
        %1743 = vmatpush1.msra.mxu0 0.0
        %1744 = vmatprep.subr.mxu0 0.0
        %1745 = vmatpush1.msra.mxu0 0.0
        %1746 = vmatprep.subr.mxu0 0.0
        %1747 = vmatpush1.msra.mxu0 0.0
        %1748 = vmatprep.subr.mxu0 0.0
        %1749 = vmatpush1.msra.mxu0 %v1713
        %1750 = vmatprep.subr.mxu0 0.0
        %1751 = vmatpush1.msra.mxu0 %v1712
        %1752 = vmatprep.subr.mxu0 0.0
        %1753 = vmatpush1.msra.mxu0 %v1711
        %1754 = vmatprep.subr.mxu0 0.0
        %1755 = vmatpush1.msra.mxu0 %v1710
        %1756 = vmatprep.subr.mxu0 0.0
        %1757 = vmatpush2.msra.mxu0 0.0
        %1758 = vmatprep.subr.mxu0 0.0
        %1759 = vmatpush2.msra.mxu0 0.0
        %1760 = vmatprep.subr.mxu0 0.0
        %1761 = vmatpush2.msra.mxu0 0.0
        %1762 = vmatprep.subr.mxu0 0.0
        %1763 = vmatpush2.msra.mxu0 0.0
        %1764 = vmatprep.subr.mxu0 0.0
        %1765 = vmatpush2.msra.mxu0 0.0
        %1766 = vmatprep.subr.mxu0 0.0
        %1767 = vmatpush2.msra.mxu0 0.0
        %1768 = vmatprep.subr.mxu0 0.0
        %1769 = vmatpush2.msra.mxu0 0.0
        %1770 = vmatprep.subr.mxu0 0.0
        %1771 = vmatpush2.msra.mxu0 0.0
        %1772 = vmatprep.subr.mxu0 0.0
        %1773 = vmatpush2.msra.mxu0 0.0
        %1774 = vmatprep.subr.mxu0 0.0
        %1775 = vmatpush2.msra.mxu0 0.0
        %1776 = vmatprep.subr.mxu0 0.0
        %1777 = vmatpush2.msra.mxu0 0.0
        %1778 = vmatprep.subr.mxu0 0.0
        %1779 = vmatpush2.msra.mxu0 0.0
        %1780 = vmatprep.subr.mxu0 0.0
        %1781 = vmatpush2.msra.mxu0 0.0
        %1782 = vmatprep.subr.mxu0 0.0
        %1783 = vmatpush2.msra.mxu0 0.0
        %1784 = vmatprep.subr.mxu0 0.0
        %1785 = vmatpush2.msra.mxu0 0.0
        %1786 = vmatprep.subr.mxu0 0.0
        %1787 = vmatpush2.msra.mxu0 0.0
        %1788 = vmatprep.mubr.f32.mxu0 0.0
        %1789 = vmatmul.mubr.f32.gmra.mxu0 %v1722
        %v1790 = vpop.f32.mrf.mxu0
        %v1791 = vadd.f32 %v1719, %v1790
        %v1792 = vpop.f32.mrf.mxu0
        %1793 = vdwg.mxu0
        %v1794 = vadd.f32 %v1709, %v1791
        %v1795 = vsel %vm634, %v1794, 0.0
        %1796 = vadd.xlane.f32.xlu0 %v1795
        %v1797 = vpop.xlane.xlu0 %1796
        %v1798 = vmul.f32 %v1797, %v638
        %v1799 = vsub.f32 %v1794, %v1798
        %v1800 = vmul.f32 %v1799, %v1799
        %v1801 = vsel %vm634, %v1800, 0.0
        %1802 = vadd.xlane.f32.xlu0 %v1801
        %v1803 = vpop.xlane.xlu0 %1802
        %v1804 = vmul.f32 %v1803, %v638
        %v1805 = vadd.f32 %v1804, 1e-05
        %v1806 = vrsqrt.pop %v1805
        %v1807 = vmul.f32 %v1799, %v1806
        %v1808 = vmul.f32 %v1807, %v653
        %v1809 = vadd.f32 %v1808, %v660
        %1810 = vst.msk [vmem:[%s622] sm:$0xff] %vm634, %v1809
        %s1811 = sand.u32 %s353, 1
        %s1812 = scalar_lea.sflag [#allocation4], %s1811
        %s1813 = sand.u32 %s353, 1
        %s1814 = smul.addr %s1813, 8
        %s1815 = scalar_lea.vmem [#allocation14], %s1814
        %s1816 = sand.u32 %s379, 1
        %s1817 = scalar_lea.sflag [#allocation16], %s1816
        %s1818 = sand.u32 %s379, 1
        %s1819 = smul.addr %s1818, 8
        %s1820 = scalar_lea.vmem [#allocation15], %s1819
        // Predicated region
        $region105: #{tpu_custom_call.1} parent=75 // pred_check
          %p1821 = pneg %p363
        $region106: #{tpu_custom_call.1} parent=75 // pred_check_branch
          %1823 = sbr.rel (%p1821) target = $region108
        $region107: #{tpu_custom_call.1} parent=75 // pred_region
          %s1825 = ssub.s32 128, 128
          %1826 = vsyncadd %s1812, %s1825
          %s1827 = smul.addr %s41, 128
          %s1828 = scalar_lea.hbm %s14, %s1827
          %s1830 = sshll.u32 %s1815, 4
          %s1831 = int_to_ptr.vmem [resolvable:$true] %s1830
          %1833 = dma.vmem_to_hbm [thread:$0]  %s1831, 128, %s1828, %s1812
        $region108: #{tpu_custom_call.1} parent=75 // pred_fallthru
          _
        // Predicated region
        $region109: #{tpu_custom_call.1} parent=75 // pred_check
          %p1834 = pneg %p389
        $region110: #{tpu_custom_call.1} parent=75 // pred_check_branch
          %1836 = sbr.rel (%p1834) target = $region112
        $region111: #{tpu_custom_call.1} parent=75 // pred_region
          %s1838 = ssub.s32 128, 128
          %1839 = vsyncadd %s1817, %s1838
          %s1840 = smul.addr %s41, 128
          %s1841 = scalar_lea.hbm %s15, %s1840
          %s1843 = sshll.u32 %s1820, 4
          %s1844 = int_to_ptr.vmem [resolvable:$true] %s1843
          %1846 = dma.vmem_to_hbm [thread:$0]  %s1844, 128, %s1841, %s1817
        $region112: #{tpu_custom_call.1} parent=75 // pred_fallthru
          _
      $region76: #{tpu_custom_call.1} parent=5 // pred_fallthru
        _
      %p1847 = scmp.le.s32.totalorder 2, %s36
      // Predicated region
      $region113: #{tpu_custom_call.1} parent=5 // pred_check
        %p1848 = pneg %p1847
      $region114: #{tpu_custom_call.1} parent=5 // pred_check_branch
        %1850 = sbr.rel (%p1848) target = $region116
      $region115: #{tpu_custom_call.1} parent=5 // pred_region
        %s1851 = ssub.s32 %s36, 2
        // Predicated region
        $region117: #{tpu_custom_call.1} parent=115 // pred_check
          %p1852 = pneg %p369
        $region118: #{tpu_custom_call.1} parent=115 // pred_check_branch
          %1854 = sbr.rel (%p1852) target = $region120
        $region119: #{tpu_custom_call.1} parent=115 // pred_region
          %s1855 = sand.u32 %s354, 1
          %s1856 = scalar_lea.sflag [#allocation4], %s1855
          %s1857 = sand.u32 %s354, 1
          %s1858 = smul.addr %s1857, 8
          %s1859 = scalar_lea.vmem [#allocation14], %s1858
          %1860 = dma.done %s1856, 128
        $region120: #{tpu_custom_call.1} parent=115 // pred_fallthru
          _
        // Predicated region
        $region121: #{tpu_custom_call.1} parent=115 // pred_check
          %p1861 = pneg %p395
        $region122: #{tpu_custom_call.1} parent=115 // pred_check_branch
          %1863 = sbr.rel (%p1861) target = $region124
        $region123: #{tpu_custom_call.1} parent=115 // pred_region
          %s1864 = sand.u32 %s380, 1
          %s1865 = scalar_lea.sflag [#allocation16], %s1864
          %s1866 = sand.u32 %s380, 1
          %s1867 = smul.addr %s1866, 8
          %s1868 = scalar_lea.vmem [#allocation15], %s1867
          %1869 = dma.done %s1865, 128
        $region124: #{tpu_custom_call.1} parent=115 // pred_fallthru
          _
      $region116: #{tpu_custom_call.1} parent=5 // pred_fallthru
        _
    $region6: #{tpu_custom_call.1} parent=1 // loop_footer
      %s40 = sadd.s32 1, %s36
    $region7: #{tpu_custom_call.1} parent=1 // loop_footer_branch
      %35 = sbr.rel target = $region3
    $region8: #{tpu_custom_call.1} parent=1 // loop_exit
      _
    %1870 = vsyncpa [#allocation3], 1
    %s1871 = scalar_lea.sflag [#allocation3], 1
    %1872 = vsyncpa %s1871, 1
    %1873 = vsyncpa [#allocation6], 1
    %s1874 = scalar_lea.sflag [#allocation6], 1
    %1875 = vsyncpa %s1874, 1
    %1876 = vsyncpa [#allocation9], 1
    %1877 = vsyncpa [#allocation12], 1
    %1878 = vsyncpa [#allocation4], 1
    %s1879 = scalar_lea.sflag [#allocation4], 1
    %1880 = vsyncpa %s1879, 1
    %1881 = vsyncpa [#allocation16], 1
    %s1882 = scalar_lea.sflag [#allocation16], 1
    %1883 = vsyncpa %s1882, 1

</llo_original>
